<compile_context>
chip_gen: v7x
topology: tpu7x:2x2x1
jax: 0.10.0
libtpu: 0.0.40
codegen_flags: <defaults>
</compile_context>

<pallas_src>
import math
import functools

import jax
import jax.numpy as jnp
from jax.experimental import pallas as pl
from jax.experimental.pallas import tpu as pltpu


# --------------------------- generation-aware sizing ---------------------------

def _tpu_vmem_capacity_bytes():
    try:
        info = pltpu.get_tpu_info()
        cap = int(getattr(info, "vmem_capacity_bytes", 0) or 0)
        if cap > 0:
            return cap
    except Exception:
        pass
    return 0


_VMEM_PHYS = _tpu_vmem_capacity_bytes()
if _VMEM_PHYS:
    # Leave ~20% headroom for internal scratch / semaphores / spill.
    _VMEM_LIMIT = min(int(_VMEM_PHYS * 0.8), 110 << 20)
else:
    # Hardware query unavailable: 64 MiB is safe on every generation.
    _VMEM_LIMIT = 64 << 20
_BIG_VMEM = _VMEM_LIMIT >= (80 << 20)         # v5e / v6e class (128 MiB physical)

_TM_TARGET = 256                               # LHS row tile (multiple of 8)
_COL_TILE_TARGET = 512 if _BIG_VMEM else 256   # lane tile for projections / lm_head
_FF_TILE_TARGET = 1024 if _BIG_VMEM else 256   # d_ff tile for the SwiGLU FFN
_SEQ_TILE_TARGET = 256 if _BIG_VMEM else 128   # flash-attention q/k tile


def _cparams(*semantics):
    return pltpu.CompilerParams(dimension_semantics=semantics,
                                vmem_limit_bytes=int(_VMEM_LIMIT))


def _round_up(x, m):
    return ((x + m - 1) // m) * m


def _prep_rows(x2d, tm=None):
    """Pick a row tile (multiple of 8, <= _TM_TARGET) and zero-pad rows to it."""
    M = x2d.shape[0]
    if tm is None:
        tm = _TM_TARGET if M >= _TM_TARGET else _round_up(M, 8)
    Mp = _round_up(M, tm)
    if Mp != M:
        x2d = jnp.pad(x2d, ((0, Mp - M), (0, 0)))
    return x2d, tm, M


def _col_tile(N, target):
    """Lane-dim tile: largest multiple of 128 <= target dividing N, else the
    full dim (legal whole-array block).  Large lane dims (vocab, d_ff) are
    padded to 128-multiples at init, so the fallback only hits small dims."""
    if N < 128 or N % 128 != 0:
        return N
    t = min(target, N)
    t -= t % 128
    while N % t != 0:
        t -= 128
    return t


def _pad_to_128(w, axis):
    """Zero-pad `axis` of a weight to a multiple of 128 (no-op if small/aligned)."""
    n = w.shape[axis]
    if n < 128 or n % 128 == 0:
        return w
    pad = [(0, 0)] * w.ndim
    pad[axis] = (0, _round_up(n, 128) - n)
    return jnp.pad(w, pad)


# ------------------------------ Pallas kernels -------------------------------

def _ln_matmul_kernel(x_ref, g_ref, w_ref, o_ref, h_ref, *, eps):
    # o = (rmsnorm(x) * g) @ W.  The normalized bf16 activation h is computed
    # once per row tile (column tile 0) and cached in VMEM scratch; the column
    # grid axis is "arbitrary" so the scratch carries across column tiles.
    @pl.when(pl.program_id(1) == 0)
    def _():
        x = x_ref[...].astype(jnp.float32)
        ms = jnp.mean(x * x, axis=-1, keepdims=True)
        h_ref[...] = (x * jax.lax.rsqrt(ms + eps) * g_ref[...]).astype(jnp.bfloat16)

    o_ref[...] = jnp.dot(h_ref[...], w_ref[...],
                         preferred_element_type=jnp.float32).astype(o_ref.dtype)


def _matmul_residual_kernel(x_ref, w_ref, r_ref, o_ref):
    # o = x @ W + residual ; x:(tm,K) bf16, W:(K,tn) bf16, r:(tm,tn) f32.
    y = jnp.dot(x_ref[...].astype(jnp.bfloat16), w_ref[...],
                preferred_element_type=jnp.float32)
    o_ref[...] = (y + r_ref[...].astype(jnp.float32)).astype(o_ref.dtype)


def _ffn_kernel(x_ref, g_ref, w1_ref, w3_ref, w2_ref, o_ref, h_ref, *, eps):
    # out = x + W2( silu(rmsnorm(x) @ W1) * (rmsnorm(x) @ W3) ),
    # d_ff tiled on grid axis 1 and accumulated into the resident output block.
    f = pl.program_id(1)

    @pl.when(f == 0)
    def _():
        x = x_ref[...].astype(jnp.float32)
        o_ref[...] = x                       # residual init (f32 resident output)
        ms = jnp.mean(x * x, axis=-1, keepdims=True)
        h_ref[...] = (x * jax.lax.rsqrt(ms + eps) * g_ref[...]).astype(jnp.bfloat16)

    h = h_ref[...]
    a = jnp.dot(h, w1_ref[...], preferred_element_type=jnp.float32)
    b = jnp.dot(h, w3_ref[...], preferred_element_type=jnp.float32)
    hh = (a * jax.nn.sigmoid(a) * b).astype(jnp.bfloat16)     # silu kept in f32
    o_ref[...] += jnp.dot(hh, w2_ref[...], preferred_element_type=jnp.float32)


def _flash_attn_kernel(q_ref, k_ref, v_ref, o_ref, m_ref, l_ref, acc_ref, *, tq, tk):
    # One batch element, all heads; grid = (B, Sq_tiles, Sk_tiles).
    # RoPE and the 1/sqrt(dk) scale are already folded into q/k outside.
    qi = pl.program_id(1)
    ki = pl.program_id(2)

    @pl.when(ki == 0)
    def _():
        m_ref[...] = jnp.full(m_ref.shape, -jnp.inf, dtype=jnp.float32)
        l_ref[...] = jnp.zeros(l_ref.shape, dtype=jnp.float32)
        acc_ref[...] = jnp.zeros(acc_ref.shape, dtype=jnp.float32)

    # Skip blocks that lie entirely above the causal diagonal (their K/V DMA is
    # also skipped via the clamped index_map in the wrapper).
    @pl.when(ki * tk <= qi * tq + (tq - 1))
    def _():
        q = q_ref[0]                                   # (H, tq, dk) bf16
        k = k_ref[0]                                   # (H, tk, dk) bf16
        s = jnp.einsum('hqd,hkd->hqk', q, k,
                       preferred_element_type=jnp.float32)      # (H, tq, tk)
        row = qi * tq + jax.lax.broadcasted_iota(jnp.int32, (1, tq, tk), 1)
        col = ki * tk + jax.lax.broadcasted_iota(jnp.int32, (1, tq, tk), 2)
        s = jnp.where(col <= row, s, jnp.float32(-1.0e9))   # matches masked_fill(-1e9)

        m_prev = m_ref[...]
        m_new = jnp.maximum(m_prev, jnp.max(s, axis=-1, keepdims=True))
        alpha = jnp.exp(m_prev - m_new)
        p = jnp.exp(s - m_new)
        l_ref[...] = alpha * l_ref[...] + jnp.sum(p, axis=-1, keepdims=True)
        acc_ref[...] = alpha * acc_ref[...] + jnp.einsum(
            'hqk,hkd->hqd', p.astype(jnp.bfloat16), v_ref[0],
            preferred_element_type=jnp.float32)
        m_ref[...] = m_new

    @pl.when(ki == pl.num_programs(2) - 1)
    def _():
        o_ref[0] = (acc_ref[...] * pl.reciprocal(l_ref[...], approx=True)
                    ).astype(o_ref.dtype)


# ------------------------------ Kernel wrappers -------------------------------

def fused_rmsnorm_matmul(x2d, gain, w_t, *, out_dtype, eps=1e-5):
    """y = (rmsnorm(x) * gain) @ w_t ; w_t is (D, N) bf16 (pre-transposed)."""
    xp, tm, M = _prep_rows(x2d)
    Mp, D = xp.shape
    N = w_t.shape[1]
    tn = _col_tile(N, _COL_TILE_TARGET)
    out = pl.pallas_call(
        functools.partial(_ln_matmul_kernel, eps=eps),
        out_shape=jax.ShapeDtypeStruct((Mp, N), out_dtype),
        grid=(Mp // tm, N // tn),
        in_specs=[pl.BlockSpec((tm, D), lambda i, j: (i, 0)),
                  pl.BlockSpec((1, D), lambda i, j: (0, 0)),
                  pl.BlockSpec((D, tn), lambda i, j: (0, j))],
        out_specs=pl.BlockSpec((tm, tn), lambda i, j: (i, j)),
        scratch_shapes=[pltpu.VMEM((tm, D), jnp.bfloat16)],
        compiler_params=_cparams("parallel", "arbitrary"),
    )(xp, gain.reshape(1, D), w_t)
    return out[:M]


def matmul_residual(x2d, w_t, resid2d):
    """y = x @ w_t + resid ; w_t is (K, N) bf16, resid is the f32 residual."""
    xp, tm, M = _prep_rows(x2d)
    rp, _, _ = _prep_rows(resid2d, tm=tm)
    Mp, K = xp.shape
    N = w_t.shape[1]
    tn = _col_tile(N, _COL_TILE_TARGET)
    out = pl.pallas_call(
        _matmul_residual_kernel,
        out_shape=jax.ShapeDtypeStruct((Mp, N), jnp.float32),
        grid=(Mp // tm, N // tn),
        in_specs=[pl.BlockSpec((tm, K), lambda i, j: (i, 0)),
                  pl.BlockSpec((K, tn), lambda i, j: (0, j)),
                  pl.BlockSpec((tm, tn), lambda i, j: (i, j))],
        out_specs=pl.BlockSpec((tm, tn), lambda i, j: (i, j)),
        compiler_params=_cparams("parallel", "parallel"),
    )(xp, w_t, rp)
    return out[:M]


def fused_rmsnorm_swiglu(x2d, gain, w1_t, w3_t, w2_t, *, eps=1e-5):
    """out = x + SwiGLU(rmsnorm(x)*gain); d_ff tiled + accumulated in the output."""
    xp, tm, M = _prep_rows(x2d)
    Mp, D = xp.shape
    F = w1_t.shape[1]
    tf = _col_tile(F, _FF_TILE_TARGET)
    out = pl.pallas_call(
        functools.partial(_ffn_kernel, eps=eps),
        out_shape=jax.ShapeDtypeStruct((Mp, D), jnp.float32),
        grid=(Mp // tm, F // tf),
        in_specs=[pl.BlockSpec((tm, D), lambda i, f: (i, 0)),
                  pl.BlockSpec((1, D), lambda i, f: (0, 0)),
                  pl.BlockSpec((D, tf), lambda i, f: (0, f)),
                  pl.BlockSpec((D, tf), lambda i, f: (0, f)),
                  pl.BlockSpec((tf, D), lambda i, f: (f, 0))],
        out_specs=pl.BlockSpec((tm, D), lambda i, f: (i, 0)),
        scratch_shapes=[pltpu.VMEM((tm, D), jnp.bfloat16)],
        compiler_params=_cparams("parallel", "arbitrary"),
    )(xp, gain.reshape(1, D), w1_t, w3_t, w2_t)
    return out[:M]


def flash_attention(q, k, v):
    """Causal flash attention.  q/k/v: (B, H, S, dk) bf16 (RoPE + scale already
    applied to q/k).  Returns (B, H, S, dk) bf16."""
    B, H, S, dk = q.shape
    tq = S if S <= 128 else _SEQ_TILE_TARGET
    Sp = _round_up(S, tq)
    if Sp != S:
        pad = ((0, 0), (0, 0), (0, Sp - S), (0, 0))
        q = jnp.pad(q, pad)
        k = jnp.pad(k, pad)
        v = jnp.pad(v, pad)
    tk = tq
    grid = (B, Sp // tq, Sp // tk)

    # K/V (and their DMA) are clamped to the diagonal: above-diagonal steps
    # re-request the same block index, so no new copy is issued.
    kv_map = lambda b, qi, ki: (b, 0, jnp.minimum(ki, qi), 0)

    out = pl.pallas_call(
        functools.partial(_flash_attn_kernel, tq=tq, tk=tk),
        out_shape=jax.ShapeDtypeStruct((B, H, Sp, dk), jnp.bfloat16),
        grid=grid,
        in_specs=[pl.BlockSpec((1, H, tq, dk), lambda b, qi, ki: (b, 0, qi, 0)),
                  pl.BlockSpec((1, H, tk, dk), kv_map),
                  pl.BlockSpec((1, H, tk, dk), kv_map)],
        out_specs=pl.BlockSpec((1, H, tq, dk), lambda b, qi, ki: (b, 0, qi, 0)),
        scratch_shapes=[pltpu.VMEM((H, tq, 1), jnp.float32),    # m
                        pltpu.VMEM((H, tq, 1), jnp.float32),    # l
                        pltpu.VMEM((H, tq, dk), jnp.float32)],  # acc
        compiler_params=_cparams("parallel", "parallel", "arbitrary"),
    )(q, k, v)
    if Sp != S:
        out = out[:, :, :S, :]
    return out


# ------------------------------ Plain-JAX glue --------------------------------

def rope_tables(S, dk, theta):
    # Interleaved-pair RoPE tables, duplicated per pair: cos[s, 2i] == cos[s, 2i+1].
    half = dk // 2
    inv_freq = 1.0 / (theta ** (jnp.arange(half, dtype=jnp.float32) * 2.0 / dk))
    ang = jnp.arange(S, dtype=jnp.float32)[:, None] * inv_freq[None, :]   # (S, half)
    cos = jnp.repeat(jnp.cos(ang), 2, axis=-1)
    sin = jnp.repeat(jnp.sin(ang), 2, axis=-1)
    return cos, sin


def _apply_rope(x, cos, sin):
    # x: (B, S, H, dk) f32; interleaved pairs (x0,x1) -> (x0*c - x1*s, x1*c + x0*s).
    B, S, H, dk = x.shape
    xp = x.reshape(B, S, H, dk // 2, 2)
    rot = jnp.stack([-xp[..., 1], xp[..., 0]], axis=-1).reshape(B, S, H, dk)
    return x * cos[None, :, None, :] + rot * sin[None, :, None, :]


def transformer_lm_forward(params, token_ids, *, num_heads, theta):
    # TODO(synk): token-embedding gather kept in plain JAX (glue, not hot path).
    B, S = token_ids.shape
    emb = params["embedding"]
    vocab, D = emb.shape
    H = num_heads
    dk = D // H
    M = B * S
    x = jnp.take(emb, token_ids, axis=0).reshape(M, D).astype(jnp.float32)
    cos, sin = rope_tables(S, dk, theta)
    scale = 1.0 / math.sqrt(dk)

    for layer in params["layers"]:
        # ---- attention block: ln1 + fused QKV projection (bf16 activations) ----
        qkv = fused_rmsnorm_matmul(x, layer["ln1"], layer["wqkv_t"],
                                   out_dtype=jnp.bfloat16)            # (M, 3D)
        qkv = qkv.reshape(B, S, 3, H, dk)
        q, k, v = qkv[:, :, 0], qkv[:, :, 1], qkv[:, :, 2]            # (B,S,H,dk)
        # RoPE applied exactly once per layer (outside the flash hot loop);
        # 1/sqrt(dk) folded into q so the kernel is pure dot-softmax-dot.
        q = (_apply_rope(q.astype(jnp.float32), cos, sin) * scale).astype(jnp.bfloat16)
        k = _apply_rope(k.astype(jnp.float32), cos, sin).astype(jnp.bfloat16)
        # TODO(synk): emit QKV directly in (B,H,S,dk) head-packed layout from the
        # projection kernel to drop these XLA transposes.
        q = q.transpose(0, 2, 1, 3)
        k = k.transpose(0, 2, 1, 3)
        v = v.transpose(0, 2, 1, 3)
        attn = flash_attention(q, k, v)                               # (B,H,S,dk)
        attn2d = attn.transpose(0, 2, 1, 3).reshape(M, D)
        x = matmul_residual(attn2d, layer["wo_t"], x)                 # x + o_proj

        # ---- FFN block: ln2 + SwiGLU + residual (single fused kernel) ----
        x = fused_rmsnorm_swiglu(x, layer["ln2"],
                                 layer["w1_t"], layer["w3_t"], layer["w2_t"])

    logits = fused_rmsnorm_matmul(x, params["ln_final"], params["lm_head_t"],
                                  out_dtype=jnp.float32)
    return logits[:, :vocab].reshape(B, S, vocab)   # drop vocab lane padding


# -------------------------------- Param init ----------------------------------

def init_params(key, vocab_size, d_model, num_heads, d_ff, num_layers):
    std = 0.02

    def lin(k, out_dim, in_dim):
        # cs336 Linear stores (out, in) and computes x @ W.T; we pre-transpose
        # once to (in, out) and keep bf16 for MXU-friendly streaming.
        w = std * jax.random.normal(k, (out_dim, in_dim), jnp.float32)
        return w.T.astype(jnp.bfloat16)

    k_emb, k_head, k_layers = jax.random.split(key, 3)
    params = {
        "embedding": std * jax.random.normal(k_emb, (vocab_size, d_model), jnp.float32),
        # Pad vocab lane dim to a multiple of 128 (zero cols; sliced off logits).
        "lm_head_t": _pad_to_128(lin(k_head, vocab_size, d_model), axis=1),
        "ln_final": jnp.ones((d_model,), jnp.float32),
        "layers": [],
    }
    for i in range(num_layers):
        lk = jax.random.split(jax.random.fold_in(k_layers, i), 7)
        wq_t = lin(lk[0], d_model, d_model)
        wk_t = lin(lk[1], d_model, d_model)
        wv_t = lin(lk[2], d_model, d_model)
        params["layers"].append({
            "ln1": jnp.ones((d_model,), jnp.float32),
            "ln2": jnp.ones((d_model,), jnp.float32),
            "wqkv_t": jnp.concatenate([wq_t, wk_t, wv_t], axis=1),          # (D, 3D)
            "wo_t": lin(lk[3], d_model, d_model),                            # (D, D)
            # Pad d_ff to a multiple of 128 (zero-padded F contributes zero).
            "w1_t": _pad_to_128(lin(lk[4], d_ff, d_model), axis=1),          # (D, Fp)
            "w3_t": _pad_to_128(lin(lk[5], d_ff, d_model), axis=1),          # (D, Fp)
            "w2_t": _pad_to_128(lin(lk[6], d_model, d_ff), axis=0),          # (Fp, D)
        })
    return params


# ----------------------------------- Main --------------------------------------

if __name__ == "__main__":
    d_model, num_heads, d_ff = 32, 4, 64
    vocab_size, context_length, num_layers = 64, 16, 2
    theta = 10000.0
    B, S = 2, 8

    key = jax.random.PRNGKey(0)
    pkey, tkey = jax.random.split(key)
    params = init_params(pkey, vocab_size, d_model, num_heads, d_ff, num_layers)
    tokens = jax.random.randint(tkey, (B, S), 0, vocab_size, dtype=jnp.int32)

    fwd = jax.jit(functools.partial(transformer_lm_forward,
                                    num_heads=num_heads, theta=theta))
    logits = jax.block_until_ready(fwd(params, tokens))
    assert logits.shape == (B, S, vocab_size), logits.shape
    assert bool(jnp.all(jnp.isfinite(logits)))
    print("KERNEL_OK")
</pallas_src>

<mosaic_0001>
module attributes {stable_mosaic.version = 11 : i64} {
  func.func @_ln_matmul_kernel(%arg0: i32, %arg1: i32, %arg2: memref<16x32xf32, #tpu.memory_space<vmem>>, %arg3: memref<1x32xf32, #tpu.memory_space<vmem>>, %arg4: memref<32x96xbf16, #tpu.memory_space<vmem>>, %arg5: memref<16x96xbf16, #tpu.memory_space<vmem>>, %arg6: memref<16x32xbf16, #tpu.memory_space<vmem>>) attributes {dimension_semantics = [#tpu.dimension_semantics<parallel>, #tpu.dimension_semantics<arbitrary>], iteration_bounds = array<i64: 1, 1>, scalar_prefetch = 0 : i64, scratch_operands = 1 : i64, tpu.core_type = #tpu.core_type<tc>, window_params = [{transform_indices = @transform_0, window_bounds = array<i64: 16, 32>}, {pipeline_mode = #tpu.pipeline_mode<synchronous>, transform_indices = @transform_1, window_bounds = array<i64: 1, 32>}, {transform_indices = @transform_2, window_bounds = array<i64: 32, 96>}, {transform_indices = @transform_3, window_bounds = array<i64: 16, 96>}]} {
    %c0_i32 = arith.constant 0 : i32
    %0 = arith.cmpi eq, %arg1, %c0_i32 : i32
    %1 = arith.extui %0 : i1 to i32
    %c0_i32_0 = arith.constant 0 : i32
    %2 = arith.cmpi ne, %1, %c0_i32_0 : i32
    scf.if %2 {
      %c0_6 = arith.constant 0 : index
      %c0_7 = arith.constant 0 : index
      %8 = vector.load %arg2[%c0_6, %c0_7] : memref<16x32xf32, #tpu.memory_space<vmem>>, vector<16x32xf32>
      %9 = arith.mulf %8, %8 : vector<16x32xf32>
      %cst_8 = arith.constant dense<0.000000e+00> : vector<16xf32>
      %10 = vector.multi_reduction <add>, %9, %cst_8 [1] : vector<16x32xf32> to vector<16xf32>
      %11 = vector.shape_cast %10 : vector<16xf32> to vector<16x1xf32>
      %cst_9 = arith.constant 3.200000e+01 : f32
      %12 = vector.broadcast %cst_9 : f32 to vector<16x1xf32>
      %13 = arith.divf %11, %12 : vector<16x1xf32>
      %cst_10 = arith.constant 9.99999974E-6 : f32
      %14 = vector.broadcast %cst_10 : f32 to vector<16x1xf32>
      %15 = arith.addf %13, %14 : vector<16x1xf32>
      %16 = math.rsqrt %15 : vector<16x1xf32>
      %17 = vector.broadcast %16 : vector<16x1xf32> to vector<16x32xf32>
      %18 = arith.mulf %8, %17 : vector<16x32xf32>
      %c0_11 = arith.constant 0 : index
      %c0_12 = arith.constant 0 : index
      %19 = vector.load %arg3[%c0_11, %c0_12] : memref<1x32xf32, #tpu.memory_space<vmem>>, vector<1x32xf32>
      %20 = vector.broadcast %19 : vector<1x32xf32> to vector<16x32xf32>
      %21 = arith.mulf %18, %20 : vector<16x32xf32>
      %22 = arith.truncf %21 : vector<16x32xf32> to vector<16x32xbf16>
      %c0_13 = arith.constant 0 : index
      %c0_14 = arith.constant 0 : index
      %23 = vector.load %arg6[%c0_13, %c0_14] : memref<16x32xbf16, #tpu.memory_space<vmem>>, vector<16x32xbf16>
      tpu.vector_store %arg6[%c0_13, %c0_14], %22 {strides = array<i32>} : memref<16x32xbf16, #tpu.memory_space<vmem>>, vector<16x32xbf16>,
    } else {
    }
    %c0 = arith.constant 0 : index
    %c0_1 = arith.constant 0 : index
    %3 = vector.load %arg6[%c0, %c0_1] : memref<16x32xbf16, #tpu.memory_space<vmem>>, vector<16x32xbf16>
    %c0_2 = arith.constant 0 : index
    %c0_3 = arith.constant 0 : index
    %4 = vector.load %arg4[%c0_2, %c0_3] : memref<32x96xbf16, #tpu.memory_space<vmem>>, vector<32x96xbf16>
    %cst = arith.constant dense<0.000000e+00> : vector<16x96xf32>
    %5 = tpu.matmul %3, %4, %cst {dimension_numbers = #tpu.dot_dimension_numbers<[1], [0], [0], [1], [0, 0, 1, 1], [], []>} : vector<16x32xbf16>, vector<32x96xbf16>, vector<16x96xf32> -> vector<16x96xf32>
    %6 = arith.truncf %5 : vector<16x96xf32> to vector<16x96xbf16>
    %c0_4 = arith.constant 0 : index
    %c0_5 = arith.constant 0 : index
    %7 = vector.load %arg5[%c0_4, %c0_5] : memref<16x96xbf16, #tpu.memory_space<vmem>>, vector<16x96xbf16>
    tpu.vector_store %arg5[%c0_4, %c0_5], %6 {strides = array<i32>} : memref<16x96xbf16, #tpu.memory_space<vmem>>, vector<16x96xbf16>,
    return
  }
  func.func @transform_0(%arg0: i32, %arg1: i32) -> (i32, i32) {
    %c0_i32 = arith.constant 0 : i32
    %c0_i32_0 = arith.constant 0 : i32
    return %arg0, %c0_i32 : i32, i32
  }
  func.func @transform_1(%arg0: i32, %arg1: i32) -> (i32, i32) {
    %c0_i32 = arith.constant 0 : i32
    %c0_i32_0 = arith.constant 0 : i32
    %c0_i32_1 = arith.constant 0 : i32
    return %c0_i32, %c0_i32_0 : i32, i32
  }
  func.func @transform_2(%arg0: i32, %arg1: i32) -> (i32, i32) {
    %c0_i32 = arith.constant 0 : i32
    %c0_i32_0 = arith.constant 0 : i32
    return %c0_i32, %arg1 : i32, i32
  }
  func.func @transform_3(%arg0: i32, %arg1: i32) -> (i32, i32) {
    %c0_i32 = arith.constant 0 : i32
    return %arg0, %arg1 : i32, i32
  }
}

module attributes {stable_mosaic.version = 11 : i64} {
  func.func @_flash_attn_kernel(%arg0: i32, %arg1: i32, %arg2: i32, %arg3: memref<1x4x8x8xbf16, #tpu.memory_space<vmem>>, %arg4: memref<1x4x8x8xbf16, #tpu.memory_space<vmem>>, %arg5: memref<1x4x8x8xbf16, #tpu.memory_space<vmem>>, %arg6: memref<1x4x8x8xbf16, #tpu.memory_space<vmem>>, %arg7: memref<4x8x1xf32, #tpu.memory_space<vmem>>, %arg8: memref<4x8x1xf32, #tpu.memory_space<vmem>>, %arg9: memref<4x8x8xf32, #tpu.memory_space<vmem>>) attributes {dimension_semantics = [#tpu.dimension_semantics<parallel>, #tpu.dimension_semantics<parallel>, #tpu.dimension_semantics<arbitrary>], iteration_bounds = array<i64: 2, 1, 1>, scalar_prefetch = 0 : i64, scratch_operands = 3 : i64, tpu.core_type = #tpu.core_type<tc>, window_params = [{transform_indices = @transform_0, window_bounds = array<i64: 1, 4, 8, 8>}, {transform_indices = @transform_1, window_bounds = array<i64: 1, 4, 8, 8>}, {transform_indices = @transform_2, window_bounds = array<i64: 1, 4, 8, 8>}, {transform_indices = @transform_3, window_bounds = array<i64: 1, 4, 8, 8>}]} {
    %c0_i32 = arith.constant 0 : i32
    %0 = arith.cmpi eq, %arg2, %c0_i32 : i32
    %1 = arith.extui %0 : i1 to i32
    %c0_i32_0 = arith.constant 0 : i32
    %2 = arith.cmpi ne, %1, %c0_i32_0 : i32
    scf.if %2 {
      %cst = arith.constant 0xFF800000 : f32
      %12 = vector.broadcast %cst : f32 to vector<4x8x1xf32>
      %c0 = arith.constant 0 : index
      %c0_5 = arith.constant 0 : index
      %c0_6 = arith.constant 0 : index
      %13 = vector.load %arg7[%c0, %c0_5, %c0_6] : memref<4x8x1xf32, #tpu.memory_space<vmem>>, vector<4x8x1xf32>
      tpu.vector_store %arg7[%c0, %c0_5, %c0_6], %12 {strides = array<i32>} : memref<4x8x1xf32, #tpu.memory_space<vmem>>, vector<4x8x1xf32>,
      %cst_7 = arith.constant 0.000000e+00 : f32
      %14 = vector.broadcast %cst_7 : f32 to vector<4x8x1xf32>
      %c0_8 = arith.constant 0 : index
      %c0_9 = arith.constant 0 : index
      %c0_10 = arith.constant 0 : index
      %15 = vector.load %arg8[%c0_8, %c0_9, %c0_10] : memref<4x8x1xf32, #tpu.memory_space<vmem>>, vector<4x8x1xf32>
      tpu.vector_store %arg8[%c0_8, %c0_9, %c0_10], %14 {strides = array<i32>} : memref<4x8x1xf32, #tpu.memory_space<vmem>>, vector<4x8x1xf32>,
      %cst_11 = arith.constant 0.000000e+00 : f32
      %16 = vector.broadcast %cst_11 : f32 to vector<4x8x8xf32>
      %c0_12 = arith.constant 0 : index
      %c0_13 = arith.constant 0 : index
      %c0_14 = arith.constant 0 : index
      %17 = vector.load %arg9[%c0_12, %c0_13, %c0_14] : memref<4x8x8xf32, #tpu.memory_space<vmem>>, vector<4x8x8xf32>
      tpu.vector_store %arg9[%c0_12, %c0_13, %c0_14], %16 {strides = array<i32>} : memref<4x8x8xf32, #tpu.memory_space<vmem>>, vector<4x8x8xf32>,
    } else {
    }
    %c8_i32 = arith.constant 8 : i32
    %3 = arith.muli %arg2, %c8_i32 : i32
    %c8_i32_1 = arith.constant 8 : i32
    %4 = arith.muli %arg1, %c8_i32_1 : i32
    %c7_i32 = arith.constant 7 : i32
    %5 = arith.addi %4, %c7_i32 : i32
    %6 = arith.cmpi sle, %3, %5 : i32
    %7 = arith.extui %6 : i1 to i32
    %c0_i32_2 = arith.constant 0 : i32
    %8 = arith.cmpi ne, %7, %c0_i32_2 : i32
    scf.if %8 {
      %c0 = arith.constant 0 : index
      %c0_5 = arith.constant 0 : index
      %c0_6 = arith.constant 0 : index
      %c0_7 = arith.constant 0 : index
      %12 = vector.load %arg3[%c0, %c0_5, %c0_6, %c0_7] : memref<1x4x8x8xbf16, #tpu.memory_space<vmem>>, vector<1x4x8x8xbf16>
      %13 = vector.shape_cast %12 : vector<1x4x8x8xbf16> to vector<4x8x8xbf16>
      %c0_8 = arith.constant 0 : index
      %c0_9 = arith.constant 0 : index
      %c0_10 = arith.constant 0 : index
      %c0_11 = arith.constant 0 : index
      %14 = vector.load %arg4[%c0_8, %c0_9, %c0_10, %c0_11] : memref<1x4x8x8xbf16, #tpu.memory_space<vmem>>, vector<1x4x8x8xbf16>
      %15 = vector.shape_cast %14 : vector<1x4x8x8xbf16> to vector<4x8x8xbf16>
      "tpu.trace_start"() <{level = 10 : i32, message = "hqd,hkd->hqk"}> : () -> ()
      %cst = arith.constant dense<0.000000e+00> : vector<4x8x8xf32>
      %16 = tpu.matmul %13, %15, %cst {dimension_numbers = #tpu.dot_dimension_numbers<[2], [2], [1], [1], [0, 0, 0, 1, 1, 1], [0], [0]>} : vector<4x8x8xbf16>, vector<4x8x8xbf16>, vector<4x8x8xf32> -> vector<4x8x8xf32>
      "tpu.trace_stop"() : () -> ()
      %c8_i32_12 = arith.constant 8 : i32
      %17 = arith.muli %arg1, %c8_i32_12 : i32
      %18 = tpu.iota {dimensions = array<i32: 1>} : vector<1x8x8xi32>
      %19 = vector.broadcast %17 : i32 to vector<1x8x8xi32>
      %20 = arith.addi %19, %18 : vector<1x8x8xi32>
      %c8_i32_13 = arith.constant 8 : i32
      %21 = arith.muli %arg2, %c8_i32_13 : i32
      %22 = tpu.iota {dimensions = array<i32: 2>} : vector<1x8x8xi32>
      %23 = vector.broadcast %21 : i32 to vector<1x8x8xi32>
      %24 = arith.addi %23, %22 : vector<1x8x8xi32>
      %25 = arith.cmpi sle, %24, %20 : vector<1x8x8xi32>
      %cst_14 = arith.constant -1.000000e+09 : f32
      %26 = vector.shape_cast %25 : vector<1x8x8xi1> to vector<1x8x8xi1>
      %27 = vector.broadcast %26 : vector<1x8x8xi1> to vector<4x8x8xi1>
      %28 = vector.broadcast %cst_14 : f32 to vector<4x8x8xf32>
      %29 = arith.select %27, %16, %28 : vector<4x8x8xi1>, vector<4x8x8xf32>
      %c0_15 = arith.constant 0 : index
      %c0_16 = arith.constant 0 : index
      %c0_17 = arith.constant 0 : index
      %30 = vector.load %arg7[%c0_15, %c0_16, %c0_17] : memref<4x8x1xf32, #tpu.memory_space<vmem>>, vector<4x8x1xf32>
      %cst_18 = arith.constant dense<0xFF800000> : vector<4x8xf32>
      %31 = vector.multi_reduction <maximumf>, %29, %cst_18 [2] : vector<4x8x8xf32> to vector<4x8xf32>
      %32 = vector.shape_cast %31 : vector<4x8xf32> to vector<4x8x1xf32>
      %33 = arith.maximumf %30, %32 : vector<4x8x1xf32>
      %34 = arith.subf %30, %33 : vector<4x8x1xf32>
      %35 = math.exp %34 : vector<4x8x1xf32>
      %36 = vector.broadcast %33 : vector<4x8x1xf32> to vector<4x8x8xf32>
      %37 = arith.subf %29, %36 : vector<4x8x8xf32>
      %38 = math.exp %37 : vector<4x8x8xf32>
      %c0_19 = arith.constant 0 : index
      %c0_20 = arith.constant 0 : index
      %c0_21 = arith.constant 0 : index
      %39 = vector.load %arg8[%c0_19, %c0_20, %c0_21] : memref<4x8x1xf32, #tpu.memory_space<vmem>>, vector<4x8x1xf32>
      %40 = arith.mulf %35, %39 : vector<4x8x1xf32>
      %cst_22 = arith.constant dense<0.000000e+00> : vector<4x8xf32>
      %41 = vector.multi_reduction <add>, %38, %cst_22 [2] : vector<4x8x8xf32> to vector<4x8xf32>
      %42 = vector.shape_cast %41 : vector<4x8xf32> to vector<4x8x1xf32>
      %43 = arith.addf %40, %42 : vector<4x8x1xf32>
      %c0_23 = arith.constant 0 : index
      %c0_24 = arith.constant 0 : index
      %c0_25 = arith.constant 0 : index
      %44 = vector.load %arg8[%c0_23, %c0_24, %c0_25] : memref<4x8x1xf32, #tpu.memory_space<vmem>>, vector<4x8x1xf32>
      tpu.vector_store %arg8[%c0_23, %c0_24, %c0_25], %43 {strides = array<i32>} : memref<4x8x1xf32, #tpu.memory_space<vmem>>, vector<4x8x1xf32>,
      %c0_26 = arith.constant 0 : index
      %c0_27 = arith.constant 0 : index
      %c0_28 = arith.constant 0 : index
      %45 = vector.load %arg9[%c0_26, %c0_27, %c0_28] : memref<4x8x8xf32, #tpu.memory_space<vmem>>, vector<4x8x8xf32>
      %46 = vector.broadcast %35 : vector<4x8x1xf32> to vector<4x8x8xf32>
      %47 = arith.mulf %46, %45 : vector<4x8x8xf32>
      %48 = arith.truncf %38 : vector<4x8x8xf32> to vector<4x8x8xbf16>
      %c0_29 = arith.constant 0 : index
      %c0_30 = arith.constant 0 : index
      %c0_31 = arith.constant 0 : index
      %c0_32 = arith.constant 0 : index
      %49 = vector.load %arg5[%c0_29, %c0_30, %c0_31, %c0_32] : memref<1x4x8x8xbf16, #tpu.memory_space<vmem>>, vector<1x4x8x8xbf16>
      %50 = vector.shape_cast %49 : vector<1x4x8x8xbf16> to vector<4x8x8xbf16>
      "tpu.trace_start"() <{level = 10 : i32, message = "hqk,hkd->hqd"}> : () -> ()
      %cst_33 = arith.constant dense<0.000000e+00> : vector<4x8x8xf32>
      %51 = tpu.matmul %48, %50, %cst_33 {dimension_numbers = #tpu.dot_dimension_numbers<[2], [1], [1], [2], [0, 0, 0, 1, 1, 2], [0], [0]>} : vector<4x8x8xbf16>, vector<4x8x8xbf16>, vector<4x8x8xf32> -> vector<4x8x8xf32>
      "tpu.trace_stop"() : () -> ()
      %52 = arith.addf %47, %51 : vector<4x8x8xf32>
      %c0_34 = arith.constant 0 : index
      %c0_35 = arith.constant 0 : index
      %c0_36 = arith.constant 0 : index
      %53 = vector.load %arg9[%c0_34, %c0_35, %c0_36] : memref<4x8x8xf32, #tpu.memory_space<vmem>>, vector<4x8x8xf32>
      tpu.vector_store %arg9[%c0_34, %c0_35, %c0_36], %52 {strides = array<i32>} : memref<4x8x8xf32, #tpu.memory_space<vmem>>, vector<4x8x8xf32>,
      %c0_37 = arith.constant 0 : index
      %c0_38 = arith.constant 0 : index
      %c0_39 = arith.constant 0 : index
      %54 = vector.load %arg7[%c0_37, %c0_38, %c0_39] : memref<4x8x1xf32, #tpu.memory_space<vmem>>, vector<4x8x1xf32>
      tpu.vector_store %arg7[%c0_37, %c0_38, %c0_39], %33 {strides = array<i32>} : memref<4x8x1xf32, #tpu.memory_space<vmem>>, vector<4x8x1xf32>,
    } else {
    }
    %c0_i32_3 = arith.constant 0 : i32
    %9 = arith.cmpi eq, %arg2, %c0_i32_3 : i32
    %10 = arith.extui %9 : i1 to i32
    %c0_i32_4 = arith.constant 0 : i32
    %11 = arith.cmpi ne, %10, %c0_i32_4 : i32
    scf.if %11 {
      %c0 = arith.constant 0 : index
      %c0_5 = arith.constant 0 : index
      %c0_6 = arith.constant 0 : index
      %12 = vector.load %arg9[%c0, %c0_5, %c0_6] : memref<4x8x8xf32, #tpu.memory_space<vmem>>, vector<4x8x8xf32>
      %c0_7 = arith.constant 0 : index
      %c0_8 = arith.constant 0 : index
      %c0_9 = arith.constant 0 : index
      %13 = vector.load %arg8[%c0_7, %c0_8, %c0_9] : memref<4x8x1xf32, #tpu.memory_space<vmem>>, vector<4x8x1xf32>
      %14 = tpu.reciprocal %13 {approx = true} : vector<4x8x1xf32> -> vector<4x8x1xf32>
      %15 = vector.broadcast %14 : vector<4x8x1xf32> to vector<4x8x8xf32>
      %16 = arith.mulf %12, %15 : vector<4x8x8xf32>
      %17 = arith.truncf %16 : vector<4x8x8xf32> to vector<4x8x8xbf16>
      %c0_10 = arith.constant 0 : index
      %c0_11 = arith.constant 0 : index
      %c0_12 = arith.constant 0 : index
      %c0_13 = arith.constant 0 : index
      %18 = vector.load %arg6[%c0_10, %c0_11, %c0_12, %c0_13] : memref<1x4x8x8xbf16, #tpu.memory_space<vmem>>, vector<1x4x8x8xbf16>
      %19 = vector.shape_cast %18 : vector<1x4x8x8xbf16> to vector<4x8x8xbf16>
      %20 = vector.shape_cast %17 : vector<4x8x8xbf16> to vector<1x4x8x8xbf16>
      tpu.vector_store %arg6[%c0_10, %c0_11, %c0_12, %c0_13], %20 {strides = array<i32>} : memref<1x4x8x8xbf16, #tpu.memory_space<vmem>>, vector<1x4x8x8xbf16>,
    } else {
    }
    return
  }
  func.func @transform_0(%arg0: i32, %arg1: i32, %arg2: i32) -> (i32, i32, i32, i32) {
    %c0_i32 = arith.constant 0 : i32
    %c0_i32_0 = arith.constant 0 : i32
    %c0_i32_1 = arith.constant 0 : i32
    return %arg0, %c0_i32, %arg1, %c0_i32_0 : i32, i32, i32, i32
  }
  func.func @transform_1(%arg0: i32, %arg1: i32, %arg2: i32) -> (i32, i32, i32, i32) {
    %0 = arith.minsi %arg2, %arg1 : i32
    %c0_i32 = arith.constant 0 : i32
    %c0_i32_0 = arith.constant 0 : i32
    %c0_i32_1 = arith.constant 0 : i32
    return %arg0, %c0_i32, %0, %c0_i32_0 : i32, i32, i32, i32
  }
  func.func @transform_2(%arg0: i32, %arg1: i32, %arg2: i32) -> (i32, i32, i32, i32) {
    %0 = arith.minsi %arg2, %arg1 : i32
    %c0_i32 = arith.constant 0 : i32
    %c0_i32_0 = arith.constant 0 : i32
    %c0_i32_1 = arith.constant 0 : i32
    return %arg0, %c0_i32, %0, %c0_i32_0 : i32, i32, i32, i32
  }
  func.func @transform_3(%arg0: i32, %arg1: i32, %arg2: i32) -> (i32, i32, i32, i32) {
    %c0_i32 = arith.constant 0 : i32
    %c0_i32_0 = arith.constant 0 : i32
    %c0_i32_1 = arith.constant 0 : i32
    return %arg0, %c0_i32, %arg1, %c0_i32_0 : i32, i32, i32, i32
  }
}

module attributes {stable_mosaic.version = 11 : i64} {
  func.func @_matmul_residual_kernel(%arg0: i32, %arg1: i32, %arg2: memref<16x32xbf16, #tpu.memory_space<vmem>>, %arg3: memref<32x32xbf16, #tpu.memory_space<vmem>>, %arg4: memref<16x32xf32, #tpu.memory_space<vmem>>, %arg5: memref<16x32xf32, #tpu.memory_space<vmem>>) attributes {dimension_semantics = [#tpu.dimension_semantics<parallel>, #tpu.dimension_semantics<parallel>], iteration_bounds = array<i64: 1, 1>, scalar_prefetch = 0 : i64, scratch_operands = 0 : i64, tpu.core_type = #tpu.core_type<tc>, window_params = [{transform_indices = @transform_0, window_bounds = array<i64: 16, 32>}, {transform_indices = @transform_1, window_bounds = array<i64: 32, 32>}, {transform_indices = @transform_2, window_bounds = array<i64: 16, 32>}, {transform_indices = @transform_3, window_bounds = array<i64: 16, 32>}]} {
    %c0 = arith.constant 0 : index
    %c0_0 = arith.constant 0 : index
    %0 = vector.load %arg2[%c0, %c0_0] : memref<16x32xbf16, #tpu.memory_space<vmem>>, vector<16x32xbf16>
    %c0_1 = arith.constant 0 : index
    %c0_2 = arith.constant 0 : index
    %1 = vector.load %arg3[%c0_1, %c0_2] : memref<32x32xbf16, #tpu.memory_space<vmem>>, vector<32x32xbf16>
    %cst = arith.constant dense<0.000000e+00> : vector<16x32xf32>
    %2 = tpu.matmul %0, %1, %cst {dimension_numbers = #tpu.dot_dimension_numbers<[1], [0], [0], [1], [0, 0, 1, 1], [], []>} : vector<16x32xbf16>, vector<32x32xbf16>, vector<16x32xf32> -> vector<16x32xf32>
    %c0_3 = arith.constant 0 : index
    %c0_4 = arith.constant 0 : index
    %3 = vector.load %arg4[%c0_3, %c0_4] : memref<16x32xf32, #tpu.memory_space<vmem>>, vector<16x32xf32>
    %4 = arith.addf %2, %3 : vector<16x32xf32>
    %c0_5 = arith.constant 0 : index
    %c0_6 = arith.constant 0 : index
    %5 = vector.load %arg5[%c0_5, %c0_6] : memref<16x32xf32, #tpu.memory_space<vmem>>, vector<16x32xf32>
    tpu.vector_store %arg5[%c0_5, %c0_6], %4 {strides = array<i32>} : memref<16x32xf32, #tpu.memory_space<vmem>>, vector<16x32xf32>,
    return
  }
  func.func @transform_0(%arg0: i32, %arg1: i32) -> (i32, i32) {
    %c0_i32 = arith.constant 0 : i32
    %c0_i32_0 = arith.constant 0 : i32
    return %arg0, %c0_i32 : i32, i32
  }
  func.func @transform_1(%arg0: i32, %arg1: i32) -> (i32, i32) {
    %c0_i32 = arith.constant 0 : i32
    %c0_i32_0 = arith.constant 0 : i32
    return %c0_i32, %arg1 : i32, i32
  }
  func.func @transform_2(%arg0: i32, %arg1: i32) -> (i32, i32) {
    %c0_i32 = arith.constant 0 : i32
    return %arg0, %arg1 : i32, i32
  }
  func.func @transform_3(%arg0: i32, %arg1: i32) -> (i32, i32) {
    %c0_i32 = arith.constant 0 : i32
    return %arg0, %arg1 : i32, i32
  }
}

module attributes {stable_mosaic.version = 11 : i64} {
  func.func @_ffn_kernel(%arg0: i32, %arg1: i32, %arg2: memref<16x32xf32, #tpu.memory_space<vmem>>, %arg3: memref<1x32xf32, #tpu.memory_space<vmem>>, %arg4: memref<32x64xbf16, #tpu.memory_space<vmem>>, %arg5: memref<32x64xbf16, #tpu.memory_space<vmem>>, %arg6: memref<64x32xbf16, #tpu.memory_space<vmem>>, %arg7: memref<16x32xf32, #tpu.memory_space<vmem>>, %arg8: memref<16x32xbf16, #tpu.memory_space<vmem>>) attributes {dimension_semantics = [#tpu.dimension_semantics<parallel>, #tpu.dimension_semantics<arbitrary>], iteration_bounds = array<i64: 1, 1>, scalar_prefetch = 0 : i64, scratch_operands = 1 : i64, tpu.core_type = #tpu.core_type<tc>, window_params = [{transform_indices = @transform_0, window_bounds = array<i64: 16, 32>}, {pipeline_mode = #tpu.pipeline_mode<synchronous>, transform_indices = @transform_1, window_bounds = array<i64: 1, 32>}, {transform_indices = @transform_2, window_bounds = array<i64: 32, 64>}, {transform_indices = @transform_3, window_bounds = array<i64: 32, 64>}, {transform_indices = @transform_4, window_bounds = array<i64: 64, 32>}, {transform_indices = @transform_5, window_bounds = array<i64: 16, 32>}]} {
    %c0_i32 = arith.constant 0 : i32
    %0 = arith.cmpi eq, %arg1, %c0_i32 : i32
    %1 = arith.extui %0 : i1 to i32
    %c0_i32_0 = arith.constant 0 : i32
    %2 = arith.cmpi ne, %1, %c0_i32_0 : i32
    scf.if %2 {
      %c0_15 = arith.constant 0 : index
      %c0_16 = arith.constant 0 : index
      %21 = vector.load %arg2[%c0_15, %c0_16] : memref<16x32xf32, #tpu.memory_space<vmem>>, vector<16x32xf32>
      %c0_17 = arith.constant 0 : index
      %c0_18 = arith.constant 0 : index
      %22 = vector.load %arg7[%c0_17, %c0_18] : memref<16x32xf32, #tpu.memory_space<vmem>>, vector<16x32xf32>
      tpu.vector_store %arg7[%c0_17, %c0_18], %21 {strides = array<i32>} : memref<16x32xf32, #tpu.memory_space<vmem>>, vector<16x32xf32>,
      %23 = arith.mulf %21, %21 : vector<16x32xf32>
      %cst_19 = arith.constant dense<0.000000e+00> : vector<16xf32>
      %24 = vector.multi_reduction <add>, %23, %cst_19 [1] : vector<16x32xf32> to vector<16xf32>
      %25 = vector.shape_cast %24 : vector<16xf32> to vector<16x1xf32>
      %cst_20 = arith.constant 3.200000e+01 : f32
      %26 = vector.broadcast %cst_20 : f32 to vector<16x1xf32>
      %27 = arith.divf %25, %26 : vector<16x1xf32>
      %cst_21 = arith.constant 9.99999974E-6 : f32
      %28 = vector.broadcast %cst_21 : f32 to vector<16x1xf32>
      %29 = arith.addf %27, %28 : vector<16x1xf32>
      %30 = math.rsqrt %29 : vector<16x1xf32>
      %31 = vector.broadcast %30 : vector<16x1xf32> to vector<16x32xf32>
      %32 = arith.mulf %21, %31 : vector<16x32xf32>
      %c0_22 = arith.constant 0 : index
      %c0_23 = arith.constant 0 : index
      %33 = vector.load %arg3[%c0_22, %c0_23] : memref<1x32xf32, #tpu.memory_space<vmem>>, vector<1x32xf32>
      %34 = vector.broadcast %33 : vector<1x32xf32> to vector<16x32xf32>
      %35 = arith.mulf %32, %34 : vector<16x32xf32>
      %36 = arith.truncf %35 : vector<16x32xf32> to vector<16x32xbf16>
      %c0_24 = arith.constant 0 : index
      %c0_25 = arith.constant 0 : index
      %37 = vector.load %arg8[%c0_24, %c0_25] : memref<16x32xbf16, #tpu.memory_space<vmem>>, vector<16x32xbf16>
      tpu.vector_store %arg8[%c0_24, %c0_25], %36 {strides = array<i32>} : memref<16x32xbf16, #tpu.memory_space<vmem>>, vector<16x32xbf16>,
    } else {
    }
    %c0 = arith.constant 0 : index
    %c0_1 = arith.constant 0 : index
    %3 = vector.load %arg8[%c0, %c0_1] : memref<16x32xbf16, #tpu.memory_space<vmem>>, vector<16x32xbf16>
    %c0_2 = arith.constant 0 : index
    %c0_3 = arith.constant 0 : index
    %4 = vector.load %arg4[%c0_2, %c0_3] : memref<32x64xbf16, #tpu.memory_space<vmem>>, vector<32x64xbf16>
    %cst = arith.constant dense<0.000000e+00> : vector<16x64xf32>
    %5 = tpu.matmul %3, %4, %cst {dimension_numbers = #tpu.dot_dimension_numbers<[1], [0], [0], [1], [0, 0, 1, 1], [], []>} : vector<16x32xbf16>, vector<32x64xbf16>, vector<16x64xf32> -> vector<16x64xf32>
    %c0_4 = arith.constant 0 : index
    %c0_5 = arith.constant 0 : index
    %6 = vector.load %arg5[%c0_4, %c0_5] : memref<32x64xbf16, #tpu.memory_space<vmem>>, vector<32x64xbf16>
    %cst_6 = arith.constant dense<0.000000e+00> : vector<16x64xf32>
    %7 = tpu.matmul %3, %6, %cst_6 {dimension_numbers = #tpu.dot_dimension_numbers<[1], [0], [0], [1], [0, 0, 1, 1], [], []>} : vector<16x32xbf16>, vector<32x64xbf16>, vector<16x64xf32> -> vector<16x64xf32>
    %8 = arith.negf %5 : vector<16x64xf32>
    %9 = math.exp %8 : vector<16x64xf32>
    %cst_7 = arith.constant 1.000000e+00 : f32
    %10 = vector.broadcast %cst_7 : f32 to vector<16x64xf32>
    %11 = arith.addf %10, %9 : vector<16x64xf32>
    %12 = arith.divf %10, %11 : vector<16x64xf32>
    %13 = arith.mulf %5, %12 : vector<16x64xf32>
    %14 = arith.mulf %13, %7 : vector<16x64xf32>
    %15 = arith.truncf %14 : vector<16x64xf32> to vector<16x64xbf16>
    %c0_8 = arith.constant 0 : index
    %c0_9 = arith.constant 0 : index
    %16 = vector.load %arg7[%c0_8, %c0_9] : memref<16x32xf32, #tpu.memory_space<vmem>>, vector<16x32xf32>
    %c0_10 = arith.constant 0 : index
    %c0_11 = arith.constant 0 : index
    %17 = vector.load %arg6[%c0_10, %c0_11] : memref<64x32xbf16, #tpu.memory_space<vmem>>, vector<64x32xbf16>
    %cst_12 = arith.constant dense<0.000000e+00> : vector<16x32xf32>
    %18 = tpu.matmul %15, %17, %cst_12 {dimension_numbers = #tpu.dot_dimension_numbers<[1], [0], [0], [1], [0, 0, 1, 1], [], []>} : vector<16x64xbf16>, vector<64x32xbf16>, vector<16x32xf32> -> vector<16x32xf32>
    %19 = arith.addf %16, %18 : vector<16x32xf32>
    %c0_13 = arith.constant 0 : index
    %c0_14 = arith.constant 0 : index
    %20 = vector.load %arg7[%c0_13, %c0_14] : memref<16x32xf32, #tpu.memory_space<vmem>>, vector<16x32xf32>
    tpu.vector_store %arg7[%c0_13, %c0_14], %19 {strides = array<i32>} : memref<16x32xf32, #tpu.memory_space<vmem>>, vector<16x32xf32>,
    return
  }
  func.func @transform_0(%arg0: i32, %arg1: i32) -> (i32, i32) {
    %c0_i32 = arith.constant 0 : i32
    %c0_i32_0 = arith.constant 0 : i32
    return %arg0, %c0_i32 : i32, i32
  }
  func.func @transform_1(%arg0: i32, %arg1: i32) -> (i32, i32) {
    %c0_i32 = arith.constant 0 : i32
    %c0_i32_0 = arith.constant 0 : i32
    %c0_i32_1 = arith.constant 0 : i32
    return %c0_i32, %c0_i32_0 : i32, i32
  }
  func.func @transform_2(%arg0: i32, %arg1: i32) -> (i32, i32) {
    %c0_i32 = arith.constant 0 : i32
    %c0_i32_0 = arith.constant 0 : i32
    return %c0_i32, %arg1 : i32, i32
  }
  func.func @transform_3(%arg0: i32, %arg1: i32) -> (i32, i32) {
    %c0_i32 = arith.constant 0 : i32
    %c0_i32_0 = arith.constant 0 : i32
    return %c0_i32, %arg1 : i32, i32
  }
  func.func @transform_4(%arg0: i32, %arg1: i32) -> (i32, i32) {
    %c0_i32 = arith.constant 0 : i32
    %c0_i32_0 = arith.constant 0 : i32
    return %arg1, %c0_i32 : i32, i32
  }
  func.func @transform_5(%arg0: i32, %arg1: i32) -> (i32, i32) {
    %c0_i32 = arith.constant 0 : i32
    %c0_i32_0 = arith.constant 0 : i32
    return %arg0, %c0_i32 : i32, i32
  }
}

module attributes {stable_mosaic.version = 11 : i64} {
  func.func @_ln_matmul_kernel(%arg0: i32, %arg1: i32, %arg2: memref<16x32xf32, #tpu.memory_space<vmem>>, %arg3: memref<1x32xf32, #tpu.memory_space<vmem>>, %arg4: memref<32x64xbf16, #tpu.memory_space<vmem>>, %arg5: memref<16x64xf32, #tpu.memory_space<vmem>>, %arg6: memref<16x32xbf16, #tpu.memory_space<vmem>>) attributes {dimension_semantics = [#tpu.dimension_semantics<parallel>, #tpu.dimension_semantics<arbitrary>], iteration_bounds = array<i64: 1, 1>, scalar_prefetch = 0 : i64, scratch_operands = 1 : i64, tpu.core_type = #tpu.core_type<tc>, window_params = [{transform_indices = @transform_0, window_bounds = array<i64: 16, 32>}, {pipeline_mode = #tpu.pipeline_mode<synchronous>, transform_indices = @transform_1, window_bounds = array<i64: 1, 32>}, {transform_indices = @transform_2, window_bounds = array<i64: 32, 64>}, {transform_indices = @transform_3, window_bounds = array<i64: 16, 64>}]} {
    %c0_i32 = arith.constant 0 : i32
    %0 = arith.cmpi eq, %arg1, %c0_i32 : i32
    %1 = arith.extui %0 : i1 to i32
    %c0_i32_0 = arith.constant 0 : i32
    %2 = arith.cmpi ne, %1, %c0_i32_0 : i32
    scf.if %2 {
      %c0_6 = arith.constant 0 : index
      %c0_7 = arith.constant 0 : index
      %7 = vector.load %arg2[%c0_6, %c0_7] : memref<16x32xf32, #tpu.memory_space<vmem>>, vector<16x32xf32>
      %8 = arith.mulf %7, %7 : vector<16x32xf32>
      %cst_8 = arith.constant dense<0.000000e+00> : vector<16xf32>
      %9 = vector.multi_reduction <add>, %8, %cst_8 [1] : vector<16x32xf32> to vector<16xf32>
      %10 = vector.shape_cast %9 : vector<16xf32> to vector<16x1xf32>
      %cst_9 = arith.constant 3.200000e+01 : f32
      %11 = vector.broadcast %cst_9 : f32 to vector<16x1xf32>
      %12 = arith.divf %10, %11 : vector<16x1xf32>
      %cst_10 = arith.constant 9.99999974E-6 : f32
      %13 = vector.broadcast %cst_10 : f32 to vector<16x1xf32>
      %14 = arith.addf %12, %13 : vector<16x1xf32>
      %15 = math.rsqrt %14 : vector<16x1xf32>
      %16 = vector.broadcast %15 : vector<16x1xf32> to vector<16x32xf32>
      %17 = arith.mulf %7, %16 : vector<16x32xf32>
      %c0_11 = arith.constant 0 : index
      %c0_12 = arith.constant 0 : index
      %18 = vector.load %arg3[%c0_11, %c0_12] : memref<1x32xf32, #tpu.memory_space<vmem>>, vector<1x32xf32>
      %19 = vector.broadcast %18 : vector<1x32xf32> to vector<16x32xf32>
      %20 = arith.mulf %17, %19 : vector<16x32xf32>
      %21 = arith.truncf %20 : vector<16x32xf32> to vector<16x32xbf16>
      %c0_13 = arith.constant 0 : index
      %c0_14 = arith.constant 0 : index
      %22 = vector.load %arg6[%c0_13, %c0_14] : memref<16x32xbf16, #tpu.memory_space<vmem>>, vector<16x32xbf16>
      tpu.vector_store %arg6[%c0_13, %c0_14], %21 {strides = array<i32>} : memref<16x32xbf16, #tpu.memory_space<vmem>>, vector<16x32xbf16>,
    } else {
    }
    %c0 = arith.constant 0 : index
    %c0_1 = arith.constant 0 : index
    %3 = vector.load %arg6[%c0, %c0_1] : memref<16x32xbf16, #tpu.memory_space<vmem>>, vector<16x32xbf16>
    %c0_2 = arith.constant 0 : index
    %c0_3 = arith.constant 0 : index
    %4 = vector.load %arg4[%c0_2, %c0_3] : memref<32x64xbf16, #tpu.memory_space<vmem>>, vector<32x64xbf16>
    %cst = arith.constant dense<0.000000e+00> : vector<16x64xf32>
    %5 = tpu.matmul %3, %4, %cst {dimension_numbers = #tpu.dot_dimension_numbers<[1], [0], [0], [1], [0, 0, 1, 1], [], []>} : vector<16x32xbf16>, vector<32x64xbf16>, vector<16x64xf32> -> vector<16x64xf32>
    %c0_4 = arith.constant 0 : index
    %c0_5 = arith.constant 0 : index
    %6 = vector.load %arg5[%c0_4, %c0_5] : memref<16x64xf32, #tpu.memory_space<vmem>>, vector<16x64xf32>
    tpu.vector_store %arg5[%c0_4, %c0_5], %5 {strides = array<i32>} : memref<16x64xf32, #tpu.memory_space<vmem>>, vector<16x64xf32>,
    return
  }
  func.func @transform_0(%arg0: i32, %arg1: i32) -> (i32, i32) {
    %c0_i32 = arith.constant 0 : i32
    %c0_i32_0 = arith.constant 0 : i32
    return %arg0, %c0_i32 : i32, i32
  }
  func.func @transform_1(%arg0: i32, %arg1: i32) -> (i32, i32) {
    %c0_i32 = arith.constant 0 : i32
    %c0_i32_0 = arith.constant 0 : i32
    %c0_i32_1 = arith.constant 0 : i32
    return %c0_i32, %c0_i32_0 : i32, i32
  }
  func.func @transform_2(%arg0: i32, %arg1: i32) -> (i32, i32) {
    %c0_i32 = arith.constant 0 : i32
    %c0_i32_0 = arith.constant 0 : i32
    return %c0_i32, %arg1 : i32, i32
  }
  func.func @transform_3(%arg0: i32, %arg1: i32) -> (i32, i32) {
    %c0_i32 = arith.constant 0 : i32
    return %arg0, %arg1 : i32, i32
  }
}

</mosaic_0001>

<llo_original>
// kernel: transformer_lm_forward.9
$region0: #{transformer_lm_forward.9}
  #allocation0 [shape = 'u32[]', space=smem, size = 0x4, offset = 0x4, fixed_abs, tag = 'smem constant byte address 0x4 - core index']
  #allocation1 [shape = 'u32[144,128]{1,0:T(1,128)}', space=vmem, size = 0x12000, scoped, tag = 'internal scratch']
  #allocation2 [shape = 'bf16[16,32]{1,0:T(16,128)(2,1)}', space=vmem, size = 0x1000, scoped, tag = 'scratch operand']
  %s0 = inlined_call_operand.hbm [shape: f32[16,32], index: 0, kind: input, shape index: {}]
  %s1 = inlined_call_operand.hbm [shape: f32[1,32], index: 1, kind: input, shape index: {}]
  %s2 = inlined_call_operand.hbm [shape: bf16[32,96], index: 2, kind: input, shape index: {}]
  %s3 = inlined_call_operand.hbm [shape: bf16[16,96], index: 3, kind: output, shape index: {}]
  %s4 = sld [smem:[#allocation0]]
  $region38: #{transformer_lm_forward.9} parent=0
    _
  %s6 = ssub.s32 1, %s4
  %s7 = scalar_select 0, %s6, %s4
  $region1: #{transformer_lm_forward.9} parent=0
    #allocation3 [shape = 'u8[8192]{0}', space=vmem, size = 0x2000, scoped, tag = 'input window, operand 0, single buffered']
    #allocation4 [shape = 's32[1]{0}', space=sflag, size = 0x4, scoped, tag = 'scoped memory for transformer_lm_forward.9']
    #allocation5 [shape = 's32[1]{0}', space=sflag, size = 0x4, scoped, tag = 'scoped memory for transformer_lm_forward.9']
    #allocation6 [shape = 'u8[512]{0}', space=vmem, size = 0x400, scoped, tag = 'input window, operand 1, single buffered']
    #allocation7 [shape = 's32[1]{0}', space=sflag, size = 0x4, scoped, tag = 'scoped memory for transformer_lm_forward.9']
    #allocation8 [shape = 'u8[8192]{0}', space=vmem, size = 0x2000, scoped, tag = 'input window, operand 2, single buffered']
    #allocation9 [shape = 'u8[4096]{0}', space=vmem, size = 0x1000, scoped, tag = 'output window, operand 0, single buffered']
    %8 = vsyncpa [#allocation4], 0
    %9 = vsyncpa [#allocation7], 0
    %10 = vsyncpa [#allocation5], 0
    // Predicated region
    $region2: #{transformer_lm_forward.9} parent=1 // pred_check
      _
    $region3: #{transformer_lm_forward.9} parent=1 // pred_check_branch
      %12 = sbr.rel (0) target = $region5
    $region4: #{transformer_lm_forward.9} parent=1 // pred_region
      %s14 = ssub.s32 256, 256
      %15 = vsyncadd [#allocation4], %s14
      %s16 = sshll.u32 [#allocation3], 4
      %s17 = int_to_ptr.vmem [resolvable:$true] %s16
      %22 = dma.hbm_to_vmem [thread:$0]  %s0, 256, %s17, [#allocation4], 128, 128, 8
    $region5: #{transformer_lm_forward.9} parent=1 // pred_fallthru
      _
    // Predicated region
    $region6: #{transformer_lm_forward.9} parent=1 // pred_check
      _
    $region7: #{transformer_lm_forward.9} parent=1 // pred_check_branch
      %24 = sbr.rel (0) target = $region9
    $region8: #{transformer_lm_forward.9} parent=1 // pred_region
      %s26 = ssub.s32 16, 16
      %27 = vsyncadd [#allocation7], %s26
      %s29 = sshll.u32 [#allocation6], 4
      %s30 = int_to_ptr.vmem [resolvable:$true] %s29
      %32 = dma.hbm_to_vmem [thread:$0]  %s1, 16, %s30, [#allocation7]
    $region9: #{transformer_lm_forward.9} parent=1 // pred_fallthru
      _
    // Predicated region
    $region10: #{transformer_lm_forward.9} parent=1 // pred_check
      _
    $region11: #{transformer_lm_forward.9} parent=1 // pred_check_branch
      %34 = sbr.rel (0) target = $region13
    $region12: #{transformer_lm_forward.9} parent=1 // pred_region
      %s36 = ssub.s32 256, 256
      %37 = vsyncadd [#allocation7], %s36
      %s38 = sshll.u32 [#allocation8], 4
      %s39 = int_to_ptr.vmem [resolvable:$true] %s38
      %44 = dma.hbm_to_vmem [thread:$0]  %s2, 256, %s39, [#allocation7], 64, 64, 4
    $region13: #{transformer_lm_forward.9} parent=1 // pred_fallthru
      _
    // Predicated region
    $region14: #{transformer_lm_forward.9} parent=1 // pred_check
      _
    $region15: #{transformer_lm_forward.9} parent=1 // pred_check_branch
      %46 = sbr.rel (0) target = $region17
    $region16: #{transformer_lm_forward.9} parent=1 // pred_region
      %47 = dma.done [#allocation4], 256
    $region17: #{transformer_lm_forward.9} parent=1 // pred_fallthru
      _
    // Predicated region
    $region18: #{transformer_lm_forward.9} parent=1 // pred_check
      _
    $region19: #{transformer_lm_forward.9} parent=1 // pred_check_branch
      %49 = sbr.rel (0) target = $region21
    $region20: #{transformer_lm_forward.9} parent=1 // pred_region
      %50 = dma.done [#allocation7], 16
    $region21: #{transformer_lm_forward.9} parent=1 // pred_fallthru
      _
    // Predicated region
    $region22: #{transformer_lm_forward.9} parent=1 // pred_check
      _
    $region23: #{transformer_lm_forward.9} parent=1 // pred_check_branch
      %52 = sbr.rel (0) target = $region25
    $region24: #{transformer_lm_forward.9} parent=1 // pred_region
      %53 = dma.done [#allocation7], 256
    $region25: #{transformer_lm_forward.9} parent=1 // pred_fallthru
      _
    %p55 = scmp.eq.s32.totalorder 0, 0
    // Predicated region
    $region26: #{transformer_lm_forward.9} parent=1 // pred_check
      %p56 = pneg %p55
    $region27: #{transformer_lm_forward.9} parent=1 // pred_check_branch
      %58 = sbr.rel (%p56) target = $region29
    $region28: #{transformer_lm_forward.9} parent=1 // pred_region
      %v59 = vld [vmem:[#allocation3] sm:$0xff]
      %v60 = vld [vmem:[#allocation3 + $0x8] sm:$0xff]
      %v61 = vmul.f32 %v59, %v59
      %v62 = vmul.f32 %v60, %v60
      %vm63 = vcmask 261120
      %v64 = vsel %vm63, %v61, 0.0
      %65 = vadd.xlane.f32.xlu0 %v64
      %v66 = vpop.xlane.xlu0 %65
      %v67 = vsel %vm63, %v62, 0.0
      %68 = vadd.xlane.f32.xlu0 %v67
      %v69 = vpop.xlane.xlu0 %68
      %v70 = vrcp.pop 32.0
      %v71 = vmul.f32 %v66, %v70
      %v72 = vmul.f32 %v69, %v70
      %v73 = vadd.f32 %v71, 1e-05
      %v74 = vadd.f32 %v72, 1e-05
      %v75 = vrsqrt.pop %v73
      %v76 = vrsqrt.pop %v74
      %v77 = vmul.f32 %v59, %v75
      %v78 = vmul.f32 %v60, %v76
      %v79 = vld [vmem:[#allocation6] sm:$0x1]
      %v81 = vlaneseq
      %v82 = vshrl.u32 %v81, 7
      %v83 = vsub.s32 0, %v82
      %v84 = vrot.slane %v79, %v83
      %v86 = vmul.f32 %v77, %v84
      %v87 = vmul.f32 %v78, %v84
      %v88 = vpack.c.bf16 %v87, %v86
      %89 = vst.msk [vmem:[#allocation2] sm:$0xff] %vm63, %v88
    $region29: #{transformer_lm_forward.9} parent=1 // pred_fallthru
      _
    %v90 = vld [vmem:[#allocation2] sm:$0xff]
    %v91 = vld [vmem:[#allocation8] sm:$0xf]
    %v92 = vld [vmem:[#allocation8 + $0x4] sm:$0xf]
    %v93 = vld [vmem:[#allocation8 + $0x8] sm:$0xf]
    %v94 = vld [vmem:[#allocation8 + $0xc] sm:$0xf]
    %v99 = vunpack.c.l.b16 %v91
    %v100 = vunpack.c.l.b16 %v92
    %v101 = vunpack.c.l.b16 %v93
    %v102 = vunpack.c.l.b16 %v94
    %v103 = vpack.c.b16 %v100, %v99
    %v104 = vpack.c.b16 %v102, %v101
    %vm107 = vcmask 261120
    %v109 = vsel %vm107, %v90, 0
    %111 = vmatprep.subr.bf16.mxu0 0
    %112 = vmatpush1.bf16.msra.mxu0 %v103
    %113 = vmatprep.subr.bf16.mxu0 0
    %114 = vmatpush1.bf16.msra.mxu0 %v104
    %115 = vmatprep.subr.bf16.mxu0 0
    %116 = vmatpush1.bf16.msra.mxu0 0
    %117 = vmatprep.subr.bf16.mxu0 0
    %118 = vmatpush1.bf16.msra.mxu0 0
    %119 = vmatprep.subr.bf16.mxu0 0
    %120 = vmatpush1.bf16.msra.mxu0 0
    %121 = vmatprep.subr.bf16.mxu0 0
    %122 = vmatpush1.bf16.msra.mxu0 0
    %123 = vmatprep.subr.bf16.mxu0 0
    %124 = vmatpush1.bf16.msra.mxu0 0
    %125 = vmatprep.subr.bf16.mxu0 0
    %126 = vmatpush1.bf16.msra.mxu0 0
    %127 = vmatprep.subr.bf16.mxu0 0
    %128 = vmatpush1.bf16.msra.mxu0 0
    %129 = vmatprep.subr.bf16.mxu0 0
    %130 = vmatpush1.bf16.msra.mxu0 0
    %131 = vmatprep.subr.bf16.mxu0 0
    %132 = vmatpush1.bf16.msra.mxu0 0
    %133 = vmatprep.subr.bf16.mxu0 0
    %134 = vmatpush1.bf16.msra.mxu0 0
    %135 = vmatprep.subr.bf16.mxu0 0
    %136 = vmatpush1.bf16.msra.mxu0 0
    %137 = vmatprep.subr.bf16.mxu0 0
    %138 = vmatpush1.bf16.msra.mxu0 0
    %139 = vmatprep.subr.bf16.mxu0 0
    %140 = vmatpush1.bf16.msra.mxu0 0
    %141 = vmatprep.subr.bf16.mxu0 0
    %142 = vmatpush1.bf16.msra.mxu0 0
    %143 = vmatprep.mubr.bf16.mxu0 0
    %144 = vmatmul.mubr.bf16.gmra.mrb[0].mxu0 %v109
    %v145 = vpop.f32.mrb[0].mxu0
    %v146 = vadd.f32 0.0, %v145
    %v147 = vpop.f32.mrb[0].mxu0
    %v148 = vpop.f32.mrb[0].mxu0
    %v149 = vadd.f32 0.0, %v148
    %v150 = vpop.f32.mrb[0].mxu0
    %151 = vdwg.mxu0
    %v152 = vpack.c.bf16 %v149, %v146
    %v154 = vunpack.c.l.b16 %v152
    %v155 = vunpack.c.h.b16 %v152
    %v156 = vpack.c.b16 %v154, %v154
    %v157 = vpack.c.b16 %v155, %v155
    %vm160 = vcmask 781312
    %161 = vst.msk [vmem:[#allocation9] sm:$0xf] %vm160, %v156
    %162 = vst.msk [vmem:[#allocation9 + $0x4] sm:$0xf] %vm160, %v157
    // Predicated region
    $region30: #{transformer_lm_forward.9} parent=1 // pred_check
      _
    $region31: #{transformer_lm_forward.9} parent=1 // pred_check_branch
      %164 = sbr.rel (0) target = $region33
    $region32: #{transformer_lm_forward.9} parent=1 // pred_region
      %s166 = ssub.s32 128, 128
      %167 = vsyncadd [#allocation5], %s166
      %s168 = sshll.u32 [#allocation9], 4
      %s169 = int_to_ptr.vmem [resolvable:$true] %s168
      %174 = dma.vmem_to_hbm [thread:$0]  %s169, 128, %s3, [#allocation5], 64, 64, 4
    $region33: #{transformer_lm_forward.9} parent=1 // pred_fallthru
      _
    // Predicated region
    $region34: #{transformer_lm_forward.9} parent=1 // pred_check
      _
    $region35: #{transformer_lm_forward.9} parent=1 // pred_check_branch
      %176 = sbr.rel (0) target = $region37
    $region36: #{transformer_lm_forward.9} parent=1 // pred_region
      %177 = dma.done [#allocation5], 128
    $region37: #{transformer_lm_forward.9} parent=1 // pred_fallthru
      _
    %178 = vsyncpa [#allocation4], 1
    %179 = vsyncpa [#allocation7], 1
    %180 = vsyncpa [#allocation5], 1

// kernel: transformer_lm_forward.11
$region0: #{transformer_lm_forward.11}
  #allocation0 [shape = 'u32[]', space=smem, size = 0x4, offset = 0x4, fixed_abs, tag = 'smem constant byte address 0x4 - core index']
  #allocation1 [shape = 'u32[144,128]{1,0:T(1,128)}', space=vmem, size = 0x12000, scoped, tag = 'internal scratch']
  %s0 = inlined_call_operand.hbm [shape: bf16[16,32], index: 0, kind: input, shape index: {}]
  %s1 = inlined_call_operand.hbm [shape: bf16[32,32], index: 1, kind: input, shape index: {}]
  %s2 = inlined_call_operand.hbm [shape: f32[16,32], index: 2, kind: input, shape index: {}]
  %s3 = inlined_call_operand.hbm [shape: f32[16,32], index: 3, kind: output, shape index: {}]
  %s4 = sld [smem:[#allocation0]]
  $region34: #{transformer_lm_forward.11} parent=0
    _
  %s6 = ssub.s32 1, %s4
  %s7 = scalar_select 0, %s6, %s4
  $region1: #{transformer_lm_forward.11} parent=0
    #allocation2 [shape = 'u8[4096]{0}', space=vmem, size = 0x1000, scoped, tag = 'input window, operand 0, single buffered']
    #allocation3 [shape = 's32[1]{0}', space=sflag, size = 0x4, scoped, tag = 'scoped memory for transformer_lm_forward.11']
    #allocation4 [shape = 's32[1]{0}', space=sflag, size = 0x4, scoped, tag = 'scoped memory for transformer_lm_forward.11']
    #allocation5 [shape = 'u8[8192]{0}', space=vmem, size = 0x2000, scoped, tag = 'input window, operand 1, single buffered']
    #allocation6 [shape = 's32[1]{0}', space=sflag, size = 0x4, scoped, tag = 'scoped memory for transformer_lm_forward.11']
    #allocation7 [shape = 'u8[8192]{0}', space=vmem, size = 0x2000, scoped, tag = 'input window, operand 2, single buffered']
    #allocation8 [shape = 'u8[8192]{0}', space=vmem, size = 0x2000, scoped, tag = 'output window, operand 0, single buffered']
    %8 = vsyncpa [#allocation3], 0
    %9 = vsyncpa [#allocation6], 0
    %10 = vsyncpa [#allocation4], 0
    // Predicated region
    $region2: #{transformer_lm_forward.11} parent=1 // pred_check
      _
    $region3: #{transformer_lm_forward.11} parent=1 // pred_check_branch
      %12 = sbr.rel (0) target = $region5
    $region4: #{transformer_lm_forward.11} parent=1 // pred_region
      %s14 = ssub.s32 128, 128
      %15 = vsyncadd [#allocation3], %s14
      %s16 = sshll.u32 [#allocation2], 4
      %s17 = int_to_ptr.vmem [resolvable:$true] %s16
      %22 = dma.hbm_to_vmem [thread:$0]  %s0, 128, %s17, [#allocation3], 64, 64, 4
    $region5: #{transformer_lm_forward.11} parent=1 // pred_fallthru
      _
    // Predicated region
    $region6: #{transformer_lm_forward.11} parent=1 // pred_check
      _
    $region7: #{transformer_lm_forward.11} parent=1 // pred_check_branch
      %24 = sbr.rel (0) target = $region9
    $region8: #{transformer_lm_forward.11} parent=1 // pred_region
      %s26 = ssub.s32 256, 256
      %27 = vsyncadd [#allocation6], %s26
      %s28 = sshll.u32 [#allocation5], 4
      %s29 = int_to_ptr.vmem [resolvable:$true] %s28
      %34 = dma.hbm_to_vmem [thread:$0]  %s1, 256, %s29, [#allocation6], 64, 64, 4
    $region9: #{transformer_lm_forward.11} parent=1 // pred_fallthru
      _
    // Predicated region
    $region10: #{transformer_lm_forward.11} parent=1 // pred_check
      _
    $region11: #{transformer_lm_forward.11} parent=1 // pred_check_branch
      %36 = sbr.rel (0) target = $region13
    $region12: #{transformer_lm_forward.11} parent=1 // pred_region
      %s38 = ssub.s32 256, 256
      %39 = vsyncadd [#allocation6], %s38
      %s40 = sshll.u32 [#allocation7], 4
      %s41 = int_to_ptr.vmem [resolvable:$true] %s40
      %46 = dma.hbm_to_vmem [thread:$0]  %s2, 256, %s41, [#allocation6], 128, 128, 8
    $region13: #{transformer_lm_forward.11} parent=1 // pred_fallthru
      _
    // Predicated region
    $region14: #{transformer_lm_forward.11} parent=1 // pred_check
      _
    $region15: #{transformer_lm_forward.11} parent=1 // pred_check_branch
      %48 = sbr.rel (0) target = $region17
    $region16: #{transformer_lm_forward.11} parent=1 // pred_region
      %49 = dma.done [#allocation3], 128
    $region17: #{transformer_lm_forward.11} parent=1 // pred_fallthru
      _
    // Predicated region
    $region18: #{transformer_lm_forward.11} parent=1 // pred_check
      _
    $region19: #{transformer_lm_forward.11} parent=1 // pred_check_branch
      %51 = sbr.rel (0) target = $region21
    $region20: #{transformer_lm_forward.11} parent=1 // pred_region
      %52 = dma.done [#allocation6], 256
    $region21: #{transformer_lm_forward.11} parent=1 // pred_fallthru
      _
    // Predicated region
    $region22: #{transformer_lm_forward.11} parent=1 // pred_check
      _
    $region23: #{transformer_lm_forward.11} parent=1 // pred_check_branch
      %54 = sbr.rel (0) target = $region25
    $region24: #{transformer_lm_forward.11} parent=1 // pred_region
      %55 = dma.done [#allocation6], 256
    $region25: #{transformer_lm_forward.11} parent=1 // pred_fallthru
      _
    %v57 = vld [vmem:[#allocation2] sm:$0xf]
    %v58 = vld [vmem:[#allocation2 + $0x4] sm:$0xf]
    %v59 = vld [vmem:[#allocation5] sm:$0xf]
    %v60 = vld [vmem:[#allocation5 + $0x4] sm:$0xf]
    %v61 = vld [vmem:[#allocation5 + $0x8] sm:$0xf]
    %v62 = vld [vmem:[#allocation5 + $0xc] sm:$0xf]
    %v63 = vld [vmem:[#allocation7] sm:$0xff]
    %v64 = vld [vmem:[#allocation7 + $0x8] sm:$0xff]
    %v67 = vunpack.c.l.b16 %v57
    %v68 = vunpack.c.l.b16 %v58
    %v69 = vpack.c.b16 %v68, %v67
    %v74 = vunpack.c.l.b16 %v59
    %v75 = vunpack.c.l.b16 %v60
    %v76 = vunpack.c.l.b16 %v61
    %v77 = vunpack.c.l.b16 %v62
    %v78 = vpack.c.b16 %v75, %v74
    %v79 = vpack.c.b16 %v77, %v76
    %vm82 = vcmask 261120
    %v84 = vsel %vm82, %v69, 0
    %86 = vmatprep.subr.bf16.mxu0 0
    %87 = vmatpush1.bf16.msra.mxu0 %v78
    %88 = vmatprep.subr.bf16.mxu0 0
    %89 = vmatpush1.bf16.msra.mxu0 %v79
    %90 = vmatprep.subr.bf16.mxu0 0
    %91 = vmatpush1.bf16.msra.mxu0 0
    %92 = vmatprep.subr.bf16.mxu0 0
    %93 = vmatpush1.bf16.msra.mxu0 0
    %94 = vmatprep.subr.bf16.mxu0 0
    %95 = vmatpush1.bf16.msra.mxu0 0
    %96 = vmatprep.subr.bf16.mxu0 0
    %97 = vmatpush1.bf16.msra.mxu0 0
    %98 = vmatprep.subr.bf16.mxu0 0
    %99 = vmatpush1.bf16.msra.mxu0 0
    %100 = vmatprep.subr.bf16.mxu0 0
    %101 = vmatpush1.bf16.msra.mxu0 0
    %102 = vmatprep.subr.bf16.mxu0 0
    %103 = vmatpush1.bf16.msra.mxu0 0
    %104 = vmatprep.subr.bf16.mxu0 0
    %105 = vmatpush1.bf16.msra.mxu0 0
    %106 = vmatprep.subr.bf16.mxu0 0
    %107 = vmatpush1.bf16.msra.mxu0 0
    %108 = vmatprep.subr.bf16.mxu0 0
    %109 = vmatpush1.bf16.msra.mxu0 0
    %110 = vmatprep.subr.bf16.mxu0 0
    %111 = vmatpush1.bf16.msra.mxu0 0
    %112 = vmatprep.subr.bf16.mxu0 0
    %113 = vmatpush1.bf16.msra.mxu0 0
    %114 = vmatprep.subr.bf16.mxu0 0
    %115 = vmatpush1.bf16.msra.mxu0 0
    %116 = vmatprep.subr.bf16.mxu0 0
    %117 = vmatpush1.bf16.msra.mxu0 0
    %118 = vmatprep.mubr.bf16.mxu0 0
    %119 = vmatmul.mubr.bf16.gmra.mrb[0].mxu0 %v84
    %v120 = vpop.f32.mrb[0].mxu0
    %v121 = vadd.f32 %v63, %v120
    %v122 = vpop.f32.mrb[0].mxu0
    %v123 = vpop.f32.mrb[0].mxu0
    %v124 = vadd.f32 %v64, %v123
    %v125 = vpop.f32.mrb[0].mxu0
    %126 = vdwg.mxu0
    %127 = vst.msk [vmem:[#allocation8] sm:$0xff] %vm82, %v121
    %128 = vst.msk [vmem:[#allocation8 + $0x8] sm:$0xff] %vm82, %v124
    // Predicated region
    $region26: #{transformer_lm_forward.11} parent=1 // pred_check
      _
    $region27: #{transformer_lm_forward.11} parent=1 // pred_check_branch
      %130 = sbr.rel (0) target = $region29
    $region28: #{transformer_lm_forward.11} parent=1 // pred_region
      %s132 = ssub.s32 256, 256
      %133 = vsyncadd [#allocation4], %s132
      %s134 = sshll.u32 [#allocation8], 4
      %s135 = int_to_ptr.vmem [resolvable:$true] %s134
      %140 = dma.vmem_to_hbm [thread:$0]  %s135, 256, %s3, [#allocation4], 128, 128, 8
    $region29: #{transformer_lm_forward.11} parent=1 // pred_fallthru
      _
    // Predicated region
    $region30: #{transformer_lm_forward.11} parent=1 // pred_check
      _
    $region31: #{transformer_lm_forward.11} parent=1 // pred_check_branch
      %142 = sbr.rel (0) target = $region33
    $region32: #{transformer_lm_forward.11} parent=1 // pred_region
      %143 = dma.done [#allocation4], 256
    $region33: #{transformer_lm_forward.11} parent=1 // pred_fallthru
      _
    %144 = vsyncpa [#allocation3], 1
    %145 = vsyncpa [#allocation6], 1
    %146 = vsyncpa [#allocation4], 1

// kernel: transformer_lm_forward.12
$region0: #{transformer_lm_forward.12}
  #allocation0 [shape = 'u32[]', space=smem, size = 0x4, offset = 0x4, fixed_abs, tag = 'smem constant byte address 0x4 - core index']
  #allocation1 [shape = 'u32[144,128]{1,0:T(1,128)}', space=vmem, size = 0x12000, scoped, tag = 'internal scratch']
  #allocation2 [shape = 'bf16[16,32]{1,0:T(16,128)(2,1)}', space=vmem, size = 0x1000, scoped, tag = 'scratch operand']
  %s0 = inlined_call_operand.hbm [shape: f32[16,32], index: 0, kind: input, shape index: {}]
  %s1 = inlined_call_operand.hbm [shape: f32[1,32], index: 1, kind: input, shape index: {}]
  %s2 = inlined_call_operand.hbm [shape: bf16[32,64], index: 2, kind: input, shape index: {}]
  %s3 = inlined_call_operand.hbm [shape: bf16[32,64], index: 3, kind: input, shape index: {}]
  %s4 = inlined_call_operand.hbm [shape: bf16[64,32], index: 4, kind: input, shape index: {}]
  %s5 = inlined_call_operand.hbm [shape: f32[16,32], index: 5, kind: output, shape index: {}]
  %s6 = sld [smem:[#allocation0]]
  $region54: #{transformer_lm_forward.12} parent=0
    _
  %s8 = ssub.s32 1, %s6
  %s9 = scalar_select 0, %s8, %s6
  $region1: #{transformer_lm_forward.12} parent=0
    #allocation3 [shape = 'u8[8192]{0}', space=vmem, size = 0x2000, scoped, tag = 'input window, operand 0, single buffered']
    #allocation4 [shape = 's32[1]{0}', space=sflag, size = 0x4, scoped, tag = 'scoped memory for transformer_lm_forward.12']
    #allocation5 [shape = 's32[1]{0}', space=sflag, size = 0x4, scoped, tag = 'scoped memory for transformer_lm_forward.12']
    #allocation6 [shape = 'u8[512]{0}', space=vmem, size = 0x400, scoped, tag = 'input window, operand 1, single buffered']
    #allocation7 [shape = 's32[1]{0}', space=sflag, size = 0x4, scoped, tag = 'scoped memory for transformer_lm_forward.12']
    #allocation8 [shape = 'u8[8192]{0}', space=vmem, size = 0x2000, scoped, tag = 'input window, operand 2, single buffered']
    #allocation9 [shape = 'u8[8192]{0}', space=vmem, size = 0x2000, scoped, tag = 'input window, operand 3, single buffered']
    #allocation10 [shape = 's32[1]{0}', space=sflag, size = 0x4, scoped, tag = 'scoped memory for transformer_lm_forward.12']
    #allocation11 [shape = 'u8[16384]{0}', space=vmem, size = 0x4000, scoped, tag = 'input window, operand 4, single buffered']
    #allocation12 [shape = 'u8[8192]{0}', space=vmem, size = 0x2000, scoped, tag = 'output window, operand 0, single buffered']
    %10 = vsyncpa [#allocation4], 0
    %11 = vsyncpa [#allocation7], 0
    %12 = vsyncpa [#allocation10], 0
    %13 = vsyncpa [#allocation5], 0
    // Predicated region
    $region2: #{transformer_lm_forward.12} parent=1 // pred_check
      _
    $region3: #{transformer_lm_forward.12} parent=1 // pred_check_branch
      %15 = sbr.rel (0) target = $region5
    $region4: #{transformer_lm_forward.12} parent=1 // pred_region
      %s17 = ssub.s32 256, 256
      %18 = vsyncadd [#allocation4], %s17
      %s19 = sshll.u32 [#allocation3], 4
      %s20 = int_to_ptr.vmem [resolvable:$true] %s19
      %25 = dma.hbm_to_vmem [thread:$0]  %s0, 256, %s20, [#allocation4], 128, 128, 8
    $region5: #{transformer_lm_forward.12} parent=1 // pred_fallthru
      _
    // Predicated region
    $region6: #{transformer_lm_forward.12} parent=1 // pred_check
      _
    $region7: #{transformer_lm_forward.12} parent=1 // pred_check_branch
      %27 = sbr.rel (0) target = $region9
    $region8: #{transformer_lm_forward.12} parent=1 // pred_region
      %s29 = ssub.s32 16, 16
      %30 = vsyncadd [#allocation7], %s29
      %s32 = sshll.u32 [#allocation6], 4
      %s33 = int_to_ptr.vmem [resolvable:$true] %s32
      %35 = dma.hbm_to_vmem [thread:$0]  %s1, 16, %s33, [#allocation7]
    $region9: #{transformer_lm_forward.12} parent=1 // pred_fallthru
      _
    // Predicated region
    $region10: #{transformer_lm_forward.12} parent=1 // pred_check
      _
    $region11: #{transformer_lm_forward.12} parent=1 // pred_check_branch
      %37 = sbr.rel (0) target = $region13
    $region12: #{transformer_lm_forward.12} parent=1 // pred_region
      %s39 = ssub.s32 256, 256
      %40 = vsyncadd [#allocation7], %s39
      %s41 = sshll.u32 [#allocation8], 4
      %s42 = int_to_ptr.vmem [resolvable:$true] %s41
      %47 = dma.hbm_to_vmem [thread:$0]  %s2, 256, %s42, [#allocation7], 64, 64, 4
    $region13: #{transformer_lm_forward.12} parent=1 // pred_fallthru
      _
    // Predicated region
    $region14: #{transformer_lm_forward.12} parent=1 // pred_check
      _
    $region15: #{transformer_lm_forward.12} parent=1 // pred_check_branch
      %49 = sbr.rel (0) target = $region17
    $region16: #{transformer_lm_forward.12} parent=1 // pred_region
      %s51 = ssub.s32 256, 256
      %52 = vsyncadd [#allocation10], %s51
      %s53 = sshll.u32 [#allocation9], 4
      %s54 = int_to_ptr.vmem [resolvable:$true] %s53
      %59 = dma.hbm_to_vmem [thread:$0]  %s3, 256, %s54, [#allocation10], 64, 64, 4
    $region17: #{transformer_lm_forward.12} parent=1 // pred_fallthru
      _
    // Predicated region
    $region18: #{transformer_lm_forward.12} parent=1 // pred_check
      _
    $region19: #{transformer_lm_forward.12} parent=1 // pred_check_branch
      %61 = sbr.rel (0) target = $region21
    $region20: #{transformer_lm_forward.12} parent=1 // pred_region
      %s63 = ssub.s32 512, 512
      %64 = vsyncadd [#allocation10], %s63
      %s65 = sshll.u32 [#allocation11], 4
      %s66 = int_to_ptr.vmem [resolvable:$true] %s65
      %71 = dma.hbm_to_vmem [thread:$0]  %s4, 512, %s66, [#allocation10], 64, 64, 4
    $region21: #{transformer_lm_forward.12} parent=1 // pred_fallthru
      _
    // Predicated region
    $region22: #{transformer_lm_forward.12} parent=1 // pred_check
      _
    $region23: #{transformer_lm_forward.12} parent=1 // pred_check_branch
      %73 = sbr.rel (0) target = $region25
    $region24: #{transformer_lm_forward.12} parent=1 // pred_region
      %74 = dma.done [#allocation4], 256
    $region25: #{transformer_lm_forward.12} parent=1 // pred_fallthru
      _
    // Predicated region
    $region26: #{transformer_lm_forward.12} parent=1 // pred_check
      _
    $region27: #{transformer_lm_forward.12} parent=1 // pred_check_branch
      %76 = sbr.rel (0) target = $region29
    $region28: #{transformer_lm_forward.12} parent=1 // pred_region
      %77 = dma.done [#allocation7], 16
    $region29: #{transformer_lm_forward.12} parent=1 // pred_fallthru
      _
    // Predicated region
    $region30: #{transformer_lm_forward.12} parent=1 // pred_check
      _
    $region31: #{transformer_lm_forward.12} parent=1 // pred_check_branch
      %79 = sbr.rel (0) target = $region33
    $region32: #{transformer_lm_forward.12} parent=1 // pred_region
      %80 = dma.done [#allocation7], 256
    $region33: #{transformer_lm_forward.12} parent=1 // pred_fallthru
      _
    // Predicated region
    $region34: #{transformer_lm_forward.12} parent=1 // pred_check
      _
    $region35: #{transformer_lm_forward.12} parent=1 // pred_check_branch
      %82 = sbr.rel (0) target = $region37
    $region36: #{transformer_lm_forward.12} parent=1 // pred_region
      %83 = dma.done [#allocation10], 256
    $region37: #{transformer_lm_forward.12} parent=1 // pred_fallthru
      _
    // Predicated region
    $region38: #{transformer_lm_forward.12} parent=1 // pred_check
      _
    $region39: #{transformer_lm_forward.12} parent=1 // pred_check_branch
      %85 = sbr.rel (0) target = $region41
    $region40: #{transformer_lm_forward.12} parent=1 // pred_region
      %86 = dma.done [#allocation10], 512
    $region41: #{transformer_lm_forward.12} parent=1 // pred_fallthru
      _
    %p88 = scmp.eq.s32.totalorder 0, 0
    // Predicated region
    $region42: #{transformer_lm_forward.12} parent=1 // pred_check
      %p89 = pneg %p88
    $region43: #{transformer_lm_forward.12} parent=1 // pred_check_branch
      %91 = sbr.rel (%p89) target = $region45
    $region44: #{transformer_lm_forward.12} parent=1 // pred_region
      %v92 = vld [vmem:[#allocation3] sm:$0xff]
      %v93 = vld [vmem:[#allocation3 + $0x8] sm:$0xff]
      %vm94 = vcmask 261120
      %95 = vst.msk [vmem:[#allocation12] sm:$0xff] %vm94, %v92
      %96 = vst.msk [vmem:[#allocation12 + $0x8] sm:$0xff] %vm94, %v93
      %v97 = vmul.f32 %v92, %v92
      %v98 = vmul.f32 %v93, %v93
      %v99 = vsel %vm94, %v97, 0.0
      %100 = vadd.xlane.f32.xlu0 %v99
      %v101 = vpop.xlane.xlu0 %100
      %v102 = vsel %vm94, %v98, 0.0
      %103 = vadd.xlane.f32.xlu0 %v102
      %v104 = vpop.xlane.xlu0 %103
      %v105 = vrcp.pop 32.0
      %v106 = vmul.f32 %v101, %v105
      %v107 = vmul.f32 %v104, %v105
      %v108 = vadd.f32 %v106, 1e-05
      %v109 = vadd.f32 %v107, 1e-05
      %v110 = vrsqrt.pop %v108
      %v111 = vrsqrt.pop %v109
      %v112 = vmul.f32 %v92, %v110
      %v113 = vmul.f32 %v93, %v111
      %v114 = vld [vmem:[#allocation6] sm:$0x1]
      %v116 = vlaneseq
      %v117 = vshrl.u32 %v116, 7
      %v118 = vsub.s32 0, %v117
      %v119 = vrot.slane %v114, %v118
      %v121 = vmul.f32 %v112, %v119
      %v122 = vmul.f32 %v113, %v119
      %v123 = vpack.c.bf16 %v122, %v121
      %124 = vst.msk [vmem:[#allocation2] sm:$0xff] %vm94, %v123
    $region45: #{transformer_lm_forward.12} parent=1 // pred_fallthru
      _
    %v125 = vld [vmem:[#allocation2] sm:$0xff]
    %v126 = vld [vmem:[#allocation8] sm:$0xf]
    %v127 = vld [vmem:[#allocation8 + $0x4] sm:$0xf]
    %v128 = vld [vmem:[#allocation8 + $0x8] sm:$0xf]
    %v129 = vld [vmem:[#allocation8 + $0xc] sm:$0xf]
    %v134 = vunpack.c.l.b16 %v126
    %v135 = vunpack.c.l.b16 %v127
    %v136 = vunpack.c.l.b16 %v128
    %v137 = vunpack.c.l.b16 %v129
    %v138 = vpack.c.b16 %v135, %v134
    %v139 = vpack.c.b16 %v137, %v136
    %vm142 = vcmask 261120
    %v144 = vsel %vm142, %v125, 0
    %146 = vmatprep.subr.bf16.mxu0 0
    %147 = vmatpush1.bf16.msra.mxu0 %v138
    %148 = vmatprep.subr.bf16.mxu0 0
    %149 = vmatpush1.bf16.msra.mxu0 %v139
    %150 = vmatprep.subr.bf16.mxu0 0
    %151 = vmatpush1.bf16.msra.mxu0 0
    %152 = vmatprep.subr.bf16.mxu0 0
    %153 = vmatpush1.bf16.msra.mxu0 0
    %154 = vmatprep.subr.bf16.mxu0 0
    %155 = vmatpush1.bf16.msra.mxu0 0
    %156 = vmatprep.subr.bf16.mxu0 0
    %157 = vmatpush1.bf16.msra.mxu0 0
    %158 = vmatprep.subr.bf16.mxu0 0
    %159 = vmatpush1.bf16.msra.mxu0 0
    %160 = vmatprep.subr.bf16.mxu0 0
    %161 = vmatpush1.bf16.msra.mxu0 0
    %162 = vmatprep.subr.bf16.mxu0 0
    %163 = vmatpush1.bf16.msra.mxu0 0
    %164 = vmatprep.subr.bf16.mxu0 0
    %165 = vmatpush1.bf16.msra.mxu0 0
    %166 = vmatprep.subr.bf16.mxu0 0
    %167 = vmatpush1.bf16.msra.mxu0 0
    %168 = vmatprep.subr.bf16.mxu0 0
    %169 = vmatpush1.bf16.msra.mxu0 0
    %170 = vmatprep.subr.bf16.mxu0 0
    %171 = vmatpush1.bf16.msra.mxu0 0
    %172 = vmatprep.subr.bf16.mxu0 0
    %173 = vmatpush1.bf16.msra.mxu0 0
    %174 = vmatprep.subr.bf16.mxu0 0
    %175 = vmatpush1.bf16.msra.mxu0 0
    %176 = vmatprep.subr.bf16.mxu0 0
    %177 = vmatpush1.bf16.msra.mxu0 0
    %178 = vmatprep.mubr.bf16.mxu0 0
    %179 = vmatmul.mubr.bf16.gmra.mrb[0].mxu0 %v144
    %v180 = vpop.f32.mrb[0].mxu0
    %v181 = vadd.f32 0.0, %v180
    %v182 = vpop.f32.mrb[0].mxu0
    %v183 = vpop.f32.mrb[0].mxu0
    %v184 = vadd.f32 0.0, %v183
    %v185 = vpop.f32.mrb[0].mxu0
    %186 = vdwg.mxu0
    %v187 = vld [vmem:[#allocation9] sm:$0xf]
    %v188 = vld [vmem:[#allocation9 + $0x4] sm:$0xf]
    %v189 = vld [vmem:[#allocation9 + $0x8] sm:$0xf]
    %v190 = vld [vmem:[#allocation9 + $0xc] sm:$0xf]
    %v195 = vunpack.c.l.b16 %v187
    %v196 = vunpack.c.l.b16 %v188
    %v197 = vunpack.c.l.b16 %v189
    %v198 = vunpack.c.l.b16 %v190
    %v199 = vpack.c.b16 %v196, %v195
    %v200 = vpack.c.b16 %v198, %v197
    %203 = vmatprep.subr.bf16.mxu0 0
    %204 = vmatpush1.bf16.msra.mxu0 %v199
    %205 = vmatprep.subr.bf16.mxu0 0
    %206 = vmatpush1.bf16.msra.mxu0 %v200
    %207 = vmatprep.subr.bf16.mxu0 0
    %208 = vmatpush1.bf16.msra.mxu0 0
    %209 = vmatprep.subr.bf16.mxu0 0
    %210 = vmatpush1.bf16.msra.mxu0 0
    %211 = vmatprep.subr.bf16.mxu0 0
    %212 = vmatpush1.bf16.msra.mxu0 0
    %213 = vmatprep.subr.bf16.mxu0 0
    %214 = vmatpush1.bf16.msra.mxu0 0
    %215 = vmatprep.subr.bf16.mxu0 0
    %216 = vmatpush1.bf16.msra.mxu0 0
    %217 = vmatprep.subr.bf16.mxu0 0
    %218 = vmatpush1.bf16.msra.mxu0 0
    %219 = vmatprep.subr.bf16.mxu0 0
    %220 = vmatpush1.bf16.msra.mxu0 0
    %221 = vmatprep.subr.bf16.mxu0 0
    %222 = vmatpush1.bf16.msra.mxu0 0
    %223 = vmatprep.subr.bf16.mxu0 0
    %224 = vmatpush1.bf16.msra.mxu0 0
    %225 = vmatprep.subr.bf16.mxu0 0
    %226 = vmatpush1.bf16.msra.mxu0 0
    %227 = vmatprep.subr.bf16.mxu0 0
    %228 = vmatpush1.bf16.msra.mxu0 0
    %229 = vmatprep.subr.bf16.mxu0 0
    %230 = vmatpush1.bf16.msra.mxu0 0
    %231 = vmatprep.subr.bf16.mxu0 0
    %232 = vmatpush1.bf16.msra.mxu0 0
    %233 = vmatprep.subr.bf16.mxu0 0
    %234 = vmatpush1.bf16.msra.mxu0 0
    %235 = vmatprep.mubr.bf16.mxu0 0
    %236 = vmatmul.mubr.bf16.gmra.mrb[0].mxu0 %v144
    %v237 = vpop.f32.mrb[0].mxu0
    %v238 = vadd.f32 0.0, %v237
    %v239 = vpop.f32.mrb[0].mxu0
    %v240 = vpop.f32.mrb[0].mxu0
    %v241 = vadd.f32 0.0, %v240
    %v242 = vpop.f32.mrb[0].mxu0
    %243 = vdwg.mxu0
    %v244 = vxor.u32 %v181, 2147483648
    %v245 = vxor.u32 %v184, 2147483648
    %v246 = vmul.f32 %v244, 1.442695
    %v247 = vpow.pop %v246
    %v248 = vmul.f32 %v245, 1.442695
    %v249 = vpow.pop %v248
    %v250 = vadd.f32 %v247, 1.0
    %v251 = vadd.f32 %v249, 1.0
    %v252 = vrcp.pop %v250
    %v253 = vmul.f32 1.0, %v252
    %v254 = vrcp.pop %v251
    %v255 = vmul.f32 1.0, %v254
    %v256 = vmul.f32 %v181, %v253
    %v257 = vmul.f32 %v184, %v255
    %v258 = vmul.f32 %v256, %v238
    %v259 = vmul.f32 %v257, %v241
    %v260 = vpack.c.bf16 %v259, %v258
    %v261 = vld [vmem:[#allocation12] sm:$0xff]
    %v262 = vld [vmem:[#allocation12 + $0x8] sm:$0xff]
    %v263 = vld [vmem:[#allocation11] sm:$0xf]
    %v264 = vld [vmem:[#allocation11 + $0x4] sm:$0xf]
    %v265 = vld [vmem:[#allocation11 + $0x8] sm:$0xf]
    %v266 = vld [vmem:[#allocation11 + $0xc] sm:$0xf]
    %v267 = vld [vmem:[#allocation11 + $0x10] sm:$0xf]
    %v268 = vld [vmem:[#allocation11 + $0x14] sm:$0xf]
    %v269 = vld [vmem:[#allocation11 + $0x18] sm:$0xf]
    %v270 = vld [vmem:[#allocation11 + $0x1c] sm:$0xf]
    %v279 = vunpack.c.l.b16 %v263
    %v280 = vunpack.c.l.b16 %v264
    %v281 = vunpack.c.l.b16 %v265
    %v282 = vunpack.c.l.b16 %v266
    %v283 = vunpack.c.l.b16 %v267
    %v284 = vunpack.c.l.b16 %v268
    %v285 = vunpack.c.l.b16 %v269
    %v286 = vunpack.c.l.b16 %v270
    %v287 = vpack.c.b16 %v280, %v279
    %v288 = vpack.c.b16 %v282, %v281
    %v289 = vpack.c.b16 %v284, %v283
    %v290 = vpack.c.b16 %v286, %v285
    %vm295 = vcmask 523264
    %v297 = vsel %vm295, %v260, 0
    %299 = vmatprep.subr.bf16.mxu0 0
    %300 = vmatpush1.bf16.msra.mxu0 %v287
    %301 = vmatprep.subr.bf16.mxu0 0
    %302 = vmatpush1.bf16.msra.mxu0 %v288
    %303 = vmatprep.subr.bf16.mxu0 0
    %304 = vmatpush1.bf16.msra.mxu0 %v289
    %305 = vmatprep.subr.bf16.mxu0 0
    %306 = vmatpush1.bf16.msra.mxu0 %v290
    %307 = vmatprep.subr.bf16.mxu0 0
    %308 = vmatpush1.bf16.msra.mxu0 0
    %309 = vmatprep.subr.bf16.mxu0 0
    %310 = vmatpush1.bf16.msra.mxu0 0
    %311 = vmatprep.subr.bf16.mxu0 0
    %312 = vmatpush1.bf16.msra.mxu0 0
    %313 = vmatprep.subr.bf16.mxu0 0
    %314 = vmatpush1.bf16.msra.mxu0 0
    %315 = vmatprep.subr.bf16.mxu0 0
    %316 = vmatpush1.bf16.msra.mxu0 0
    %317 = vmatprep.subr.bf16.mxu0 0
    %318 = vmatpush1.bf16.msra.mxu0 0
    %319 = vmatprep.subr.bf16.mxu0 0
    %320 = vmatpush1.bf16.msra.mxu0 0
    %321 = vmatprep.subr.bf16.mxu0 0
    %322 = vmatpush1.bf16.msra.mxu0 0
    %323 = vmatprep.subr.bf16.mxu0 0
    %324 = vmatpush1.bf16.msra.mxu0 0
    %325 = vmatprep.subr.bf16.mxu0 0
    %326 = vmatpush1.bf16.msra.mxu0 0
    %327 = vmatprep.subr.bf16.mxu0 0
    %328 = vmatpush1.bf16.msra.mxu0 0
    %329 = vmatprep.subr.bf16.mxu0 0
    %330 = vmatpush1.bf16.msra.mxu0 0
    %331 = vmatprep.mubr.bf16.mxu0 0
    %332 = vmatmul.mubr.bf16.gmra.mrb[0].mxu0 %v297
    %v333 = vpop.f32.mrb[0].mxu0
    %v334 = vadd.f32 0.0, %v333
    %v335 = vpop.f32.mrb[0].mxu0
    %v336 = vpop.f32.mrb[0].mxu0
    %v337 = vadd.f32 0.0, %v336
    %v338 = vpop.f32.mrb[0].mxu0
    %339 = vdwg.mxu0
    %v340 = vadd.f32 %v261, %v334
    %v341 = vadd.f32 %v262, %v337
    %342 = vst.msk [vmem:[#allocation12] sm:$0xff] %vm142, %v340
    %343 = vst.msk [vmem:[#allocation12 + $0x8] sm:$0xff] %vm142, %v341
    // Predicated region
    $region46: #{transformer_lm_forward.12} parent=1 // pred_check
      _
    $region47: #{transformer_lm_forward.12} parent=1 // pred_check_branch
      %345 = sbr.rel (0) target = $region49
    $region48: #{transformer_lm_forward.12} parent=1 // pred_region
      %s347 = ssub.s32 256, 256
      %348 = vsyncadd [#allocation5], %s347
      %s349 = sshll.u32 [#allocation12], 4
      %s350 = int_to_ptr.vmem [resolvable:$true] %s349
      %355 = dma.vmem_to_hbm [thread:$0]  %s350, 256, %s5, [#allocation5], 128, 128, 8
    $region49: #{transformer_lm_forward.12} parent=1 // pred_fallthru
      _
    // Predicated region
    $region50: #{transformer_lm_forward.12} parent=1 // pred_check
      _
    $region51: #{transformer_lm_forward.12} parent=1 // pred_check_branch
      %357 = sbr.rel (0) target = $region53
    $region52: #{transformer_lm_forward.12} parent=1 // pred_region
      %358 = dma.done [#allocation5], 256
    $region53: #{transformer_lm_forward.12} parent=1 // pred_fallthru
      _
    %359 = vsyncpa [#allocation4], 1
    %360 = vsyncpa [#allocation7], 1
    %361 = vsyncpa [#allocation10], 1
    %362 = vsyncpa [#allocation5], 1

// kernel: transformer_lm_forward.17
$region0: #{transformer_lm_forward.17}
  #allocation0 [shape = 'u32[]', space=smem, size = 0x4, offset = 0x4, fixed_abs, tag = 'smem constant byte address 0x4 - core index']
  #allocation1 [shape = 'u32[144,128]{1,0:T(1,128)}', space=vmem, size = 0x12000, scoped, tag = 'internal scratch']
  #allocation2 [shape = 'bf16[16,32]{1,0:T(16,128)(2,1)}', space=vmem, size = 0x1000, scoped, tag = 'scratch operand']
  %s0 = inlined_call_operand.hbm [shape: f32[16,32], index: 0, kind: input, shape index: {}]
  %s1 = inlined_call_operand.hbm [shape: f32[1,32], index: 1, kind: input, shape index: {}]
  %s2 = inlined_call_operand.hbm [shape: bf16[32,64], index: 2, kind: input, shape index: {}]
  %s3 = inlined_call_operand.hbm [shape: f32[16,64], index: 3, kind: output, shape index: {}]
  %s4 = sld [smem:[#allocation0]]
  $region38: #{transformer_lm_forward.17} parent=0
    _
  %s6 = ssub.s32 1, %s4
  %s7 = scalar_select 0, %s6, %s4
  $region1: #{transformer_lm_forward.17} parent=0
    #allocation3 [shape = 'u8[8192]{0}', space=vmem, size = 0x2000, scoped, tag = 'input window, operand 0, single buffered']
    #allocation4 [shape = 's32[1]{0}', space=sflag, size = 0x4, scoped, tag = 'scoped memory for transformer_lm_forward.17']
    #allocation5 [shape = 's32[1]{0}', space=sflag, size = 0x4, scoped, tag = 'scoped memory for transformer_lm_forward.17']
    #allocation6 [shape = 'u8[512]{0}', space=vmem, size = 0x400, scoped, tag = 'input window, operand 1, single buffered']
    #allocation7 [shape = 's32[1]{0}', space=sflag, size = 0x4, scoped, tag = 'scoped memory for transformer_lm_forward.17']
    #allocation8 [shape = 'u8[8192]{0}', space=vmem, size = 0x2000, scoped, tag = 'input window, operand 2, single buffered']
    #allocation9 [shape = 'u8[8192]{0}', space=vmem, size = 0x2000, scoped, tag = 'output window, operand 0, single buffered']
    %8 = vsyncpa [#allocation4], 0
    %9 = vsyncpa [#allocation7], 0
    %10 = vsyncpa [#allocation5], 0
    // Predicated region
    $region2: #{transformer_lm_forward.17} parent=1 // pred_check
      _
    $region3: #{transformer_lm_forward.17} parent=1 // pred_check_branch
      %12 = sbr.rel (0) target = $region5
    $region4: #{transformer_lm_forward.17} parent=1 // pred_region
      %s14 = ssub.s32 256, 256
      %15 = vsyncadd [#allocation4], %s14
      %s16 = sshll.u32 [#allocation3], 4
      %s17 = int_to_ptr.vmem [resolvable:$true] %s16
      %22 = dma.hbm_to_vmem [thread:$0]  %s0, 256, %s17, [#allocation4], 128, 128, 8
    $region5: #{transformer_lm_forward.17} parent=1 // pred_fallthru
      _
    // Predicated region
    $region6: #{transformer_lm_forward.17} parent=1 // pred_check
      _
    $region7: #{transformer_lm_forward.17} parent=1 // pred_check_branch
      %24 = sbr.rel (0) target = $region9
    $region8: #{transformer_lm_forward.17} parent=1 // pred_region
      %s26 = ssub.s32 16, 16
      %27 = vsyncadd [#allocation7], %s26
      %s29 = sshll.u32 [#allocation6], 4
      %s30 = int_to_ptr.vmem [resolvable:$true] %s29
      %32 = dma.hbm_to_vmem [thread:$0]  %s1, 16, %s30, [#allocation7]
    $region9: #{transformer_lm_forward.17} parent=1 // pred_fallthru
      _
    // Predicated region
    $region10: #{transformer_lm_forward.17} parent=1 // pred_check
      _
    $region11: #{transformer_lm_forward.17} parent=1 // pred_check_branch
      %34 = sbr.rel (0) target = $region13
    $region12: #{transformer_lm_forward.17} parent=1 // pred_region
      %s36 = ssub.s32 256, 256
      %37 = vsyncadd [#allocation7], %s36
      %s38 = sshll.u32 [#allocation8], 4
      %s39 = int_to_ptr.vmem [resolvable:$true] %s38
      %44 = dma.hbm_to_vmem [thread:$0]  %s2, 256, %s39, [#allocation7], 64, 64, 4
    $region13: #{transformer_lm_forward.17} parent=1 // pred_fallthru
      _
    // Predicated region
    $region14: #{transformer_lm_forward.17} parent=1 // pred_check
      _
    $region15: #{transformer_lm_forward.17} parent=1 // pred_check_branch
      %46 = sbr.rel (0) target = $region17
    $region16: #{transformer_lm_forward.17} parent=1 // pred_region
      %47 = dma.done [#allocation4], 256
    $region17: #{transformer_lm_forward.17} parent=1 // pred_fallthru
      _
    // Predicated region
    $region18: #{transformer_lm_forward.17} parent=1 // pred_check
      _
    $region19: #{transformer_lm_forward.17} parent=1 // pred_check_branch
      %49 = sbr.rel (0) target = $region21
    $region20: #{transformer_lm_forward.17} parent=1 // pred_region
      %50 = dma.done [#allocation7], 16
    $region21: #{transformer_lm_forward.17} parent=1 // pred_fallthru
      _
    // Predicated region
    $region22: #{transformer_lm_forward.17} parent=1 // pred_check
      _
    $region23: #{transformer_lm_forward.17} parent=1 // pred_check_branch
      %52 = sbr.rel (0) target = $region25
    $region24: #{transformer_lm_forward.17} parent=1 // pred_region
      %53 = dma.done [#allocation7], 256
    $region25: #{transformer_lm_forward.17} parent=1 // pred_fallthru
      _
    %p55 = scmp.eq.s32.totalorder 0, 0
    // Predicated region
    $region26: #{transformer_lm_forward.17} parent=1 // pred_check
      %p56 = pneg %p55
    $region27: #{transformer_lm_forward.17} parent=1 // pred_check_branch
      %58 = sbr.rel (%p56) target = $region29
    $region28: #{transformer_lm_forward.17} parent=1 // pred_region
      %v59 = vld [vmem:[#allocation3] sm:$0xff]
      %v60 = vld [vmem:[#allocation3 + $0x8] sm:$0xff]
      %v61 = vmul.f32 %v59, %v59
      %v62 = vmul.f32 %v60, %v60
      %vm63 = vcmask 261120
      %v64 = vsel %vm63, %v61, 0.0
      %65 = vadd.xlane.f32.xlu0 %v64
      %v66 = vpop.xlane.xlu0 %65
      %v67 = vsel %vm63, %v62, 0.0
      %68 = vadd.xlane.f32.xlu0 %v67
      %v69 = vpop.xlane.xlu0 %68
      %v70 = vrcp.pop 32.0
      %v71 = vmul.f32 %v66, %v70
      %v72 = vmul.f32 %v69, %v70
      %v73 = vadd.f32 %v71, 1e-05
      %v74 = vadd.f32 %v72, 1e-05
      %v75 = vrsqrt.pop %v73
      %v76 = vrsqrt.pop %v74
      %v77 = vmul.f32 %v59, %v75
      %v78 = vmul.f32 %v60, %v76
      %v79 = vld [vmem:[#allocation6] sm:$0x1]
      %v81 = vlaneseq
      %v82 = vshrl.u32 %v81, 7
      %v83 = vsub.s32 0, %v82
      %v84 = vrot.slane %v79, %v83
      %v86 = vmul.f32 %v77, %v84
      %v87 = vmul.f32 %v78, %v84
      %v88 = vpack.c.bf16 %v87, %v86
      %89 = vst.msk [vmem:[#allocation2] sm:$0xff] %vm63, %v88
    $region29: #{transformer_lm_forward.17} parent=1 // pred_fallthru
      _
    %v90 = vld [vmem:[#allocation2] sm:$0xff]
    %v91 = vld [vmem:[#allocation8] sm:$0xf]
    %v92 = vld [vmem:[#allocation8 + $0x4] sm:$0xf]
    %v93 = vld [vmem:[#allocation8 + $0x8] sm:$0xf]
    %v94 = vld [vmem:[#allocation8 + $0xc] sm:$0xf]
    %v99 = vunpack.c.l.b16 %v91
    %v100 = vunpack.c.l.b16 %v92
    %v101 = vunpack.c.l.b16 %v93
    %v102 = vunpack.c.l.b16 %v94
    %v103 = vpack.c.b16 %v100, %v99
    %v104 = vpack.c.b16 %v102, %v101
    %vm107 = vcmask 261120
    %v109 = vsel %vm107, %v90, 0
    %111 = vmatprep.subr.bf16.mxu0 0
    %112 = vmatpush1.bf16.msra.mxu0 %v103
    %113 = vmatprep.subr.bf16.mxu0 0
    %114 = vmatpush1.bf16.msra.mxu0 %v104
    %115 = vmatprep.subr.bf16.mxu0 0
    %116 = vmatpush1.bf16.msra.mxu0 0
    %117 = vmatprep.subr.bf16.mxu0 0
    %118 = vmatpush1.bf16.msra.mxu0 0
    %119 = vmatprep.subr.bf16.mxu0 0
    %120 = vmatpush1.bf16.msra.mxu0 0
    %121 = vmatprep.subr.bf16.mxu0 0
    %122 = vmatpush1.bf16.msra.mxu0 0
    %123 = vmatprep.subr.bf16.mxu0 0
    %124 = vmatpush1.bf16.msra.mxu0 0
    %125 = vmatprep.subr.bf16.mxu0 0
    %126 = vmatpush1.bf16.msra.mxu0 0
    %127 = vmatprep.subr.bf16.mxu0 0
    %128 = vmatpush1.bf16.msra.mxu0 0
    %129 = vmatprep.subr.bf16.mxu0 0
    %130 = vmatpush1.bf16.msra.mxu0 0
    %131 = vmatprep.subr.bf16.mxu0 0
    %132 = vmatpush1.bf16.msra.mxu0 0
    %133 = vmatprep.subr.bf16.mxu0 0
    %134 = vmatpush1.bf16.msra.mxu0 0
    %135 = vmatprep.subr.bf16.mxu0 0
    %136 = vmatpush1.bf16.msra.mxu0 0
    %137 = vmatprep.subr.bf16.mxu0 0
    %138 = vmatpush1.bf16.msra.mxu0 0
    %139 = vmatprep.subr.bf16.mxu0 0
    %140 = vmatpush1.bf16.msra.mxu0 0
    %141 = vmatprep.subr.bf16.mxu0 0
    %142 = vmatpush1.bf16.msra.mxu0 0
    %143 = vmatprep.mubr.bf16.mxu0 0
    %144 = vmatmul.mubr.bf16.gmra.mrb[0].mxu0 %v109
    %v145 = vpop.f32.mrb[0].mxu0
    %v146 = vadd.f32 0.0, %v145
    %v147 = vpop.f32.mrb[0].mxu0
    %v148 = vpop.f32.mrb[0].mxu0
    %v149 = vadd.f32 0.0, %v148
    %v150 = vpop.f32.mrb[0].mxu0
    %151 = vdwg.mxu0
    %vm152 = vcmask 523264
    %153 = vst.msk [vmem:[#allocation9] sm:$0xff] %vm152, %v146
    %154 = vst.msk [vmem:[#allocation9 + $0x8] sm:$0xff] %vm152, %v149
    // Predicated region
    $region30: #{transformer_lm_forward.17} parent=1 // pred_check
      _
    $region31: #{transformer_lm_forward.17} parent=1 // pred_check_branch
      %156 = sbr.rel (0) target = $region33
    $region32: #{transformer_lm_forward.17} parent=1 // pred_region
      %s158 = ssub.s32 256, 256
      %159 = vsyncadd [#allocation5], %s158
      %s160 = sshll.u32 [#allocation9], 4
      %s161 = int_to_ptr.vmem [resolvable:$true] %s160
      %166 = dma.vmem_to_hbm [thread:$0]  %s161, 256, %s3, [#allocation5], 128, 128, 8
    $region33: #{transformer_lm_forward.17} parent=1 // pred_fallthru
      _
    // Predicated region
    $region34: #{transformer_lm_forward.17} parent=1 // pred_check
      _
    $region35: #{transformer_lm_forward.17} parent=1 // pred_check_branch
      %168 = sbr.rel (0) target = $region37
    $region36: #{transformer_lm_forward.17} parent=1 // pred_region
      %169 = dma.done [#allocation5], 256
    $region37: #{transformer_lm_forward.17} parent=1 // pred_fallthru
      _
    %170 = vsyncpa [#allocation4], 1
    %171 = vsyncpa [#allocation7], 1
    %172 = vsyncpa [#allocation5], 1

// kernel: transformer_lm_forward.10
$region0: #{transformer_lm_forward.10}
  #allocation0 [shape = 'u32[]', space=smem, size = 0x4, offset = 0x4, fixed_abs, tag = 'smem constant byte address 0x4 - core index']
  #allocation1 [shape = 'u32[144,128]{1,0:T(1,128)}', space=vmem, size = 0x12000, scoped, tag = 'internal scratch']
  #allocation2 [shape = 'f32[4,8,1]{2,1,0:T(8,128)}', space=vmem, size = 0x4000, scoped, tag = 'scratch operand']
  #allocation3 [shape = 'f32[4,8,1]{2,1,0:T(8,128)}', space=vmem, size = 0x4000, scoped, tag = 'scratch operand']
  #allocation4 [shape = 'f32[4,8,8]{2,1,0:T(8,128)}', space=vmem, size = 0x4000, scoped, tag = 'scratch operand']
  %s0 = inlined_call_operand.hbm [shape: bf16[2,4,8,8], index: 0, kind: input, shape index: {}]
  %s1 = inlined_call_operand.hbm [shape: bf16[2,4,8,8], index: 1, kind: input, shape index: {}]
  %s2 = inlined_call_operand.hbm [shape: bf16[2,4,8,8], index: 2, kind: input, shape index: {}]
  %s3 = inlined_call_operand.hbm [shape: bf16[2,4,8,8], index: 3, kind: output, shape index: {}]
  %s4 = sld [smem:[#allocation0]]
  $region69: #{transformer_lm_forward.10} parent=0
    _
  %s6 = ssub.s32 1, %s4
  %s7 = scalar_select 0, %s6, %s4
  $region1: #{transformer_lm_forward.10} parent=0
    #allocation5 [shape = 'u8[16384]{0}', space=vmem, size = 0x4000, scoped, tag = 'input window, operand 0']
    #allocation6 [shape = 's32[2]{0}', space=sflag, size = 0x8, scoped, tag = 'scoped memory for transformer_lm_forward.10']
    #allocation7 [shape = 's32[2]{0}', space=sflag, size = 0x8, scoped, tag = 'scoped memory for transformer_lm_forward.10']
    #allocation8 [shape = 'u8[16384]{0}', space=vmem, size = 0x4000, scoped, tag = 'input window, operand 1']
    #allocation9 [shape = 's32[2]{0}', space=sflag, size = 0x8, scoped, tag = 'scoped memory for transformer_lm_forward.10']
    #allocation10 [shape = 'u8[16384]{0}', space=vmem, size = 0x4000, scoped, tag = 'input window, operand 2']
    #allocation11 [shape = 'u8[16384]{0}', space=vmem, size = 0x4000, scoped, tag = 'output window, operand 0']
    %8 = vsyncpa [#allocation6], 0
    %s9 = scalar_lea.sflag [#allocation6], 1
    %10 = vsyncpa %s9, 0
    %11 = vsyncpa [#allocation9], 0
    %s12 = scalar_lea.sflag [#allocation9], 1
    %13 = vsyncpa %s12, 0
    %14 = vsyncpa [#allocation7], 0
    %s15 = scalar_lea.sflag [#allocation7], 1
    %16 = vsyncpa %s15, 0
    loop: start=0, step=1, limit=4
    $region2: #{transformer_lm_forward.10} parent=1 // loop_pre_header
      _
    $region3: #{transformer_lm_forward.10} parent=1 // loop_header
      %s18 = sphi 0, %s22
      %p19 = scmp.ge.s32.totalorder %s18, 4
      %s25 = sphi 0, %s44
      %s26 = sphi 0, %s40
      %s27 = sphi 0, %s36
      %s28 = sphi 0, %s25
      %s29 = sphi 0, %s26
      %s30 = sphi 0, %s27
      %s31 = sphi 0, %s28
      %s32 = sphi 0, %s29
      %s33 = sphi 0, %s30
      %s49 = sphi 0, %s51
      %s52 = sphi 0, %s49
      %s53 = sphi 0, %s52
      %s69 = sphi 0, %s53
      %s81 = sphi 0, %s83
      %s84 = sphi 0, %s81
      %s85 = sphi 0, %s84
      %s101 = sphi 0, %s85
      %s113 = sphi 0, %s115
      %s116 = sphi 0, %s113
      %s117 = sphi 0, %s116
      %s133 = sphi 0, %s117
      %s141 = sphi 0, %s143
      %s144 = sphi 0, %s141
      %s145 = sphi 0, %s144
      %s161 = sphi 0, %s145
    $region4: #{transformer_lm_forward.10} parent=1 // loop_header_branch
      %21 = sbr.rel (%p19) target = $region8
    $region5: #{transformer_lm_forward.10} parent=1 // loop_body
      %s23 = ssub.s32 %s18, 1
      %s24 = ssub.s32 %s18, 2
      %s34 = sadd.s32 1, %s27
      %p35 = scmp.ge.s32.totalorder %s34, 1
      %s36 = scalar_select %p35, 0, %s34
      %s37 = sadd.s32 1, %s26
      %s38 = scalar_select %p35, %s37, %s26
      %p39 = scmp.ge.s32.totalorder %s38, 1
      %s40 = scalar_select %p39, 0, %s38
      %s41 = sadd.s32 1, %s25
      %s42 = scalar_select %p39, %s41, %s25
      %p43 = scmp.ge.s32.totalorder %s42, 2
      %s44 = scalar_select %p43, 0, %s42
      %s45 = ssub.s32 %s25, %s44
      %s46 = ssub.s32 %s26, %s40
      %s47 = sor.u32 %s45, %s46
      %p48 = scmp.eq.s32.totalorder %s47, 0
      %s50 = sadd.s32 %s49, 1
      %s51 = scalar_select %p48, %s49, %s50
      %p54 = pneg %p48
      %p55 = scmp.eq.s32.totalorder %s18, 1
      %p56 = por %p54, %p55
      %p57 = scmp.ne.s32.totalorder %s49, %s52
      %p58 = scmp.eq.s32.totalorder %s18, 0
      %p59 = por %p57, %p58
      %p60 = scmp.ne.s32.totalorder %s49, %s52
      %p61 = scmp.eq.s32.totalorder %s23, 1
      %p62 = por %p60, %p61
      %p63 = scmp.ne.s32.totalorder %s52, %s53
      %p64 = scmp.eq.s32.totalorder %s23, 0
      %p65 = por %p63, %p64
      %p66 = scmp.ne.s32.totalorder %s52, %s53
      %p67 = scmp.eq.s32.totalorder %s24, 1
      %p68 = por %p66, %p67
      %p70 = scmp.ne.s32.totalorder %s53, %s69
      %p71 = scmp.eq.s32.totalorder %s24, 0
      %p72 = por %p70, %p71
      %p73 = scmp.lt.s32.totalorder %s27, %s26
      %s74 = scalar_select %p73, %s27, %s26
      %p75 = scmp.lt.s32.totalorder %s36, %s40
      %s76 = scalar_select %p75, %s36, %s40
      %s77 = ssub.s32 %s25, %s44
      %s78 = ssub.s32 %s74, %s76
      %s79 = sor.u32 %s77, %s78
      %p80 = scmp.eq.s32.totalorder %s79, 0
      %s82 = sadd.s32 %s81, 1
      %s83 = scalar_select %p80, %s81, %s82
      %p86 = pneg %p80
      %p87 = scmp.eq.s32.totalorder %s18, 1
      %p88 = por %p86, %p87
      %p89 = scmp.ne.s32.totalorder %s81, %s84
      %p90 = scmp.eq.s32.totalorder %s18, 0
      %p91 = por %p89, %p90
      %p92 = scmp.ne.s32.totalorder %s81, %s84
      %p93 = scmp.eq.s32.totalorder %s23, 1
      %p94 = por %p92, %p93
      %p95 = scmp.ne.s32.totalorder %s84, %s85
      %p96 = scmp.eq.s32.totalorder %s23, 0
      %p97 = por %p95, %p96
      %p98 = scmp.ne.s32.totalorder %s84, %s85
      %p99 = scmp.eq.s32.totalorder %s24, 1
      %p100 = por %p98, %p99
      %p102 = scmp.ne.s32.totalorder %s85, %s101
      %p103 = scmp.eq.s32.totalorder %s24, 0
      %p104 = por %p102, %p103
      %p105 = scmp.lt.s32.totalorder %s27, %s26
      %s106 = scalar_select %p105, %s27, %s26
      %p107 = scmp.lt.s32.totalorder %s36, %s40
      %s108 = scalar_select %p107, %s36, %s40
      %s109 = ssub.s32 %s25, %s44
      %s110 = ssub.s32 %s106, %s108
      %s111 = sor.u32 %s109, %s110
      %p112 = scmp.eq.s32.totalorder %s111, 0
      %s114 = sadd.s32 %s113, 1
      %s115 = scalar_select %p112, %s113, %s114
      %p118 = pneg %p112
      %p119 = scmp.eq.s32.totalorder %s18, 1
      %p120 = por %p118, %p119
      %p121 = scmp.ne.s32.totalorder %s113, %s116
      %p122 = scmp.eq.s32.totalorder %s18, 0
      %p123 = por %p121, %p122
      %p124 = scmp.ne.s32.totalorder %s113, %s116
      %p125 = scmp.eq.s32.totalorder %s23, 1
      %p126 = por %p124, %p125
      %p127 = scmp.ne.s32.totalorder %s116, %s117
      %p128 = scmp.eq.s32.totalorder %s23, 0
      %p129 = por %p127, %p128
      %p130 = scmp.ne.s32.totalorder %s116, %s117
      %p131 = scmp.eq.s32.totalorder %s24, 1
      %p132 = por %p130, %p131
      %p134 = scmp.ne.s32.totalorder %s117, %s133
      %p135 = scmp.eq.s32.totalorder %s24, 0
      %p136 = por %p134, %p135
      %s137 = ssub.s32 %s25, %s44
      %s138 = ssub.s32 %s26, %s40
      %s139 = sor.u32 %s137, %s138
      %p140 = scmp.eq.s32.totalorder %s139, 0
      %s142 = sadd.s32 %s141, 1
      %s143 = scalar_select %p140, %s141, %s142
      %p146 = pneg %p140
      %p147 = scmp.eq.s32.totalorder %s18, 1
      %p148 = por %p146, %p147
      %p149 = scmp.ne.s32.totalorder %s141, %s144
      %p150 = scmp.eq.s32.totalorder %s18, 0
      %p151 = por %p149, %p150
      %p152 = scmp.ne.s32.totalorder %s141, %s144
      %p153 = scmp.eq.s32.totalorder %s23, 1
      %p154 = por %p152, %p153
      %p155 = scmp.ne.s32.totalorder %s144, %s145
      %p156 = scmp.eq.s32.totalorder %s23, 0
      %p157 = por %p155, %p156
      %p158 = scmp.ne.s32.totalorder %s144, %s145
      %p159 = scmp.eq.s32.totalorder %s24, 1
      %p160 = por %p158, %p159
      %p162 = scmp.ne.s32.totalorder %s145, %s161
      %p163 = scmp.eq.s32.totalorder %s24, 0
      %p164 = por %p162, %p163
      %p165 = scmp.le.s32.totalorder 1, %s18
      %p166 = scmp.lt.s32.totalorder %s18, 3
      %p167 = pnand %p165, %p166
      %p168 = pneg %p167
      // Predicated region
      $region9: #{transformer_lm_forward.10} parent=5 // pred_check
        _
      $region10: #{transformer_lm_forward.10} parent=5 // pred_check_branch
        %170 = sbr.rel (%p167) target = $region12
      $region11: #{transformer_lm_forward.10} parent=5 // pred_region
        %s171 = ssub.s32 %s18, 1
      $region12: #{transformer_lm_forward.10} parent=5 // pred_fallthru
        _
      %p172 = scmp.lt.s32.totalorder %s18, 2
      // Predicated region
      $region13: #{transformer_lm_forward.10} parent=5 // pred_check
        %p173 = pneg %p172
      $region14: #{transformer_lm_forward.10} parent=5 // pred_check_branch
        %175 = sbr.rel (%p173) target = $region16
      $region15: #{transformer_lm_forward.10} parent=5 // pred_region
        // Predicated region
        $region17: #{transformer_lm_forward.10} parent=15 // pred_check
          %p176 = pneg %p59
        $region18: #{transformer_lm_forward.10} parent=15 // pred_check_branch
          %178 = sbr.rel (%p176) target = $region20
        $region19: #{transformer_lm_forward.10} parent=15 // pred_region
          %s179 = sand.u32 %s49, 1
          %s180 = scalar_lea.sflag [#allocation6], %s179
          %s181 = sand.u32 %s49, 1
          %s182 = smul.addr %s181, 16
          %s183 = scalar_lea.vmem [#allocation5], %s182
          %s185 = ssub.s32 256, 256
          %186 = vsyncadd %s180, %s185
          %s187 = smul.addr %s25, 4
          %s188 = sadd.s32 %s26, %s187
          %s189 = smul.addr %s188, 64
          %s190 = scalar_lea.hbm %s0, %s189
          %s191 = sshll.u32 %s183, 4
          %s192 = int_to_ptr.vmem [resolvable:$true] %s191
          %197 = dma.hbm_to_vmem [thread:$0]  %s190, 256, %s192, %s180, 64, 64, 4
        $region20: #{transformer_lm_forward.10} parent=15 // pred_fallthru
          _
        // Predicated region
        $region21: #{transformer_lm_forward.10} parent=15 // pred_check
          %p198 = pneg %p91
        $region22: #{transformer_lm_forward.10} parent=15 // pred_check_branch
          %200 = sbr.rel (%p198) target = $region24
        $region23: #{transformer_lm_forward.10} parent=15 // pred_region
          %s201 = sand.u32 %s18, 1
          %s202 = scalar_lea.sflag [#allocation9], %s201
          %s203 = sand.u32 %s81, 1
          %s204 = smul.addr %s203, 16
          %s205 = scalar_lea.vmem [#allocation8], %s204
          %p206 = scmp.lt.s32.totalorder %s27, %s26
          %s207 = scalar_select %p206, %s27, %s26
          %s209 = ssub.s32 256, 256
          %210 = vsyncadd %s202, %s209
          %s211 = smul.addr %s25, 4
          %s212 = sadd.s32 %s207, %s211
          %s213 = smul.addr %s212, 64
          %s214 = scalar_lea.hbm %s1, %s213
          %s215 = sshll.u32 %s205, 4
          %s216 = int_to_ptr.vmem [resolvable:$true] %s215
          %221 = dma.hbm_to_vmem [thread:$0]  %s214, 256, %s216, %s202, 64, 64, 4
        $region24: #{transformer_lm_forward.10} parent=15 // pred_fallthru
          _
        // Predicated region
        $region25: #{transformer_lm_forward.10} parent=15 // pred_check
          %p222 = pneg %p123
        $region26: #{transformer_lm_forward.10} parent=15 // pred_check_branch
          %224 = sbr.rel (%p222) target = $region28
        $region27: #{transformer_lm_forward.10} parent=15 // pred_region
          %s225 = sand.u32 %s18, 1
          %s226 = scalar_lea.sflag [#allocation9], %s225
          %s227 = sand.u32 %s113, 1
          %s228 = smul.addr %s227, 16
          %s229 = scalar_lea.vmem [#allocation10], %s228
          %p230 = scmp.lt.s32.totalorder %s27, %s26
          %s231 = scalar_select %p230, %s27, %s26
          %s233 = ssub.s32 256, 256
          %234 = vsyncadd %s226, %s233
          %s235 = smul.addr %s25, 4
          %s236 = sadd.s32 %s231, %s235
          %s237 = smul.addr %s236, 64
          %s238 = scalar_lea.hbm %s2, %s237
          %s239 = sshll.u32 %s229, 4
          %s240 = int_to_ptr.vmem [resolvable:$true] %s239
          %245 = dma.hbm_to_vmem [thread:$0]  %s238, 256, %s240, %s226, 64, 64, 4
        $region28: #{transformer_lm_forward.10} parent=15 // pred_fallthru
          _
      $region16: #{transformer_lm_forward.10} parent=5 // pred_fallthru
        _
      %p246 = scmp.le.s32.totalorder 1, %s18
      %p247 = scmp.lt.s32.totalorder %s18, 3
      %p248 = pnand %p246, %p247
      %p249 = pneg %p248
      // Predicated region
      $region29: #{transformer_lm_forward.10} parent=5 // pred_check
        _
      $region30: #{transformer_lm_forward.10} parent=5 // pred_check_branch
        %251 = sbr.rel (%p248) target = $region32
      $region31: #{transformer_lm_forward.10} parent=5 // pred_region
        %s252 = ssub.s32 %s18, 1
        %s253 = sand.u32 %s52, 1
        %s254 = scalar_lea.sflag [#allocation6], %s253
        %s255 = sand.u32 %s52, 1
        %s256 = smul.addr %s255, 16
        %s257 = scalar_lea.vmem [#allocation5], %s256
        // Predicated region
        $region33: #{transformer_lm_forward.10} parent=31 // pred_check
          %p258 = pneg %p65
        $region34: #{transformer_lm_forward.10} parent=31 // pred_check_branch
          %260 = sbr.rel (%p258) target = $region36
        $region35: #{transformer_lm_forward.10} parent=31 // pred_region
          %261 = dma.done %s254, 256
        $region36: #{transformer_lm_forward.10} parent=31 // pred_fallthru
          _
        %s262 = sand.u32 %s23, 1
        %s263 = scalar_lea.sflag [#allocation9], %s262
        %s264 = sand.u32 %s84, 1
        %s265 = smul.addr %s264, 16
        %s266 = scalar_lea.vmem [#allocation8], %s265
        // Predicated region
        $region37: #{transformer_lm_forward.10} parent=31 // pred_check
          %p267 = pneg %p97
        $region38: #{transformer_lm_forward.10} parent=31 // pred_check_branch
          %269 = sbr.rel (%p267) target = $region40
        $region39: #{transformer_lm_forward.10} parent=31 // pred_region
          %270 = dma.done %s263, 256
        $region40: #{transformer_lm_forward.10} parent=31 // pred_fallthru
          _
        %s271 = sand.u32 %s23, 1
        %s272 = scalar_lea.sflag [#allocation9], %s271
        %s273 = sand.u32 %s116, 1
        %s274 = smul.addr %s273, 16
        %s275 = scalar_lea.vmem [#allocation10], %s274
        // Predicated region
        $region41: #{transformer_lm_forward.10} parent=31 // pred_check
          %p276 = pneg %p129
        $region42: #{transformer_lm_forward.10} parent=31 // pred_check_branch
          %278 = sbr.rel (%p276) target = $region44
        $region43: #{transformer_lm_forward.10} parent=31 // pred_region
          %279 = dma.done %s272, 256
        $region44: #{transformer_lm_forward.10} parent=31 // pred_fallthru
          _
        %s280 = sand.u32 %s52, 1
        %s281 = scalar_lea.sflag [#allocation6], %s280
        %s282 = sand.u32 %s52, 1
        %s283 = smul.addr %s282, 16
        %s284 = scalar_lea.vmem [#allocation5], %s283
        %p285 = pneg %p65
        %p286 = pneg %p62
        %s287 = sand.u32 %s23, 1
        %s288 = scalar_lea.sflag [#allocation9], %s287
        %s289 = sand.u32 %s84, 1
        %s290 = smul.addr %s289, 16
        %s291 = scalar_lea.vmem [#allocation8], %s290
        %p292 = pneg %p97
        %p293 = pneg %p94
        %s294 = sand.u32 %s23, 1
        %s295 = scalar_lea.sflag [#allocation9], %s294
        %s296 = sand.u32 %s116, 1
        %s297 = smul.addr %s296, 16
        %s298 = scalar_lea.vmem [#allocation10], %s297
        %p299 = pneg %p129
        %p300 = pneg %p126
        %p301 = pneg %p157
        %p302 = pneg %p154
        %s303 = sand.u32 %s144, 1
        %s304 = scalar_lea.sflag [#allocation7], %s303
        %s305 = sand.u32 %s144, 1
        %s306 = smul.addr %s305, 16
        %s307 = scalar_lea.vmem [#allocation11], %s306
        %p308 = scmp.lt.s32.totalorder %s30, %s29
        %s309 = scalar_select %p308, %s30, %s29
        %p310 = scmp.lt.s32.totalorder %s30, %s29
        %s311 = scalar_select %p310, %s30, %s29
        %p313 = scmp.eq.s32.totalorder %s30, 0
        // Predicated region
        $region45: #{transformer_lm_forward.10} parent=31 // pred_check
          %p314 = pneg %p313
        $region46: #{transformer_lm_forward.10} parent=31 // pred_check_branch
          %316 = sbr.rel (%p314) target = $region48
        $region47: #{transformer_lm_forward.10} parent=31 // pred_region
          %vm317 = vcmask 7168
          %318 = vst.msk [vmem:[#allocation2] sm:$0xff] %vm317, -inf
          %319 = vst.msk [vmem:[#allocation2 + $0x8] sm:$0xff] %vm317, -inf
          %320 = vst.msk [vmem:[#allocation2 + $0x10] sm:$0xff] %vm317, -inf
          %321 = vst.msk [vmem:[#allocation2 + $0x18] sm:$0xff] %vm317, -inf
          %322 = vst.msk [vmem:[#allocation3] sm:$0xff] %vm317, 0.0
          %323 = vst.msk [vmem:[#allocation3 + $0x8] sm:$0xff] %vm317, 0.0
          %324 = vst.msk [vmem:[#allocation3 + $0x10] sm:$0xff] %vm317, 0.0
          %325 = vst.msk [vmem:[#allocation3 + $0x18] sm:$0xff] %vm317, 0.0
          %vm326 = vcmask 64512
          %327 = vst.msk [vmem:[#allocation4] sm:$0xff] %vm326, 0.0
          %328 = vst.msk [vmem:[#allocation4 + $0x8] sm:$0xff] %vm326, 0.0
          %329 = vst.msk [vmem:[#allocation4 + $0x10] sm:$0xff] %vm326, 0.0
          %330 = vst.msk [vmem:[#allocation4 + $0x18] sm:$0xff] %vm326, 0.0
        $region48: #{transformer_lm_forward.10} parent=31 // pred_fallthru
          _
        %s331 = smul.u32 %s30, 8
        %s332 = smul.u32 %s29, 8
        %s333 = sadd.s32 %s332, 7
        %p334 = scmp.le.s32.totalorder %s331, %s333
        // Predicated region
        $region49: #{transformer_lm_forward.10} parent=31 // pred_check
          %p335 = pneg %p334
        $region50: #{transformer_lm_forward.10} parent=31 // pred_check_branch
          %337 = sbr.rel (%p335) target = $region52
        $region51: #{transformer_lm_forward.10} parent=31 // pred_region
          %v338 = vld [vmem:[%s257] sm:$0xf]
          %v339 = vld [vmem:[%s257 + $0x4] sm:$0xf]
          %v340 = vld [vmem:[%s257 + $0x8] sm:$0xf]
          %v341 = vld [vmem:[%s257 + $0xc] sm:$0xf]
          %v342 = vld [vmem:[%s266] sm:$0xf]
          %v343 = vld [vmem:[%s266 + $0x4] sm:$0xf]
          %v344 = vld [vmem:[%s266 + $0x8] sm:$0xf]
          %v345 = vld [vmem:[%s266 + $0xc] sm:$0xf]
          %vm346 = vcmask 64512
          %v348 = vsel %vm346, %v338, 0
          %v351 = vsel %vm346, %v342, 0
          %353 = vmatprep.subr.bf16.mxu0 0
          %354 = vmatpush1.bf16.xpose.msra.mxu0 %v351
          %355 = vmatprep.subr.bf16.mxu0 0
          %356 = vmatpush1.bf16.xpose.msra.mxu0 0
          %357 = vmatprep.subr.bf16.mxu0 0
          %358 = vmatpush1.bf16.xpose.msra.mxu0 0
          %359 = vmatprep.subr.bf16.mxu0 0
          %360 = vmatpush1.bf16.xpose.msra.mxu0 0
          %361 = vmatprep.subr.bf16.mxu0 0
          %362 = vmatpush1.bf16.xpose.msra.mxu0 0
          %363 = vmatprep.subr.bf16.mxu0 0
          %364 = vmatpush1.bf16.xpose.msra.mxu0 0
          %365 = vmatprep.subr.bf16.mxu0 0
          %366 = vmatpush1.bf16.xpose.msra.mxu0 0
          %367 = vmatprep.subr.bf16.mxu0 0
          %368 = vmatpush1.bf16.xpose.msra.mxu0 0
          %369 = vmatprep.subr.bf16.mxu0 0
          %370 = vmatpush1.bf16.xpose.msra.mxu0 0
          %371 = vmatprep.subr.bf16.mxu0 0
          %372 = vmatpush1.bf16.xpose.msra.mxu0 0
          %373 = vmatprep.subr.bf16.mxu0 0
          %374 = vmatpush1.bf16.xpose.msra.mxu0 0
          %375 = vmatprep.subr.bf16.mxu0 0
          %376 = vmatpush1.bf16.xpose.msra.mxu0 0
          %377 = vmatprep.subr.bf16.mxu0 0
          %378 = vmatpush1.bf16.xpose.msra.mxu0 0
          %379 = vmatprep.subr.bf16.mxu0 0
          %380 = vmatpush1.bf16.xpose.msra.mxu0 0
          %381 = vmatprep.subr.bf16.mxu0 0
          %382 = vmatpush1.bf16.xpose.msra.mxu0 0
          %383 = vmatprep.subr.bf16.mxu0 0
          %384 = vmatpush1.bf16.xpose.msra.mxu0 0
          %385 = vmatprep.mubr.bf16.mxu0 0
          %386 = vmatmul.mubr.bf16.gmra.mrb[0].mxu0 %v348
          %v387 = vpop.f32.mrb[0].mxu0
          %v388 = vadd.f32 0.0, %v387
          %v389 = vpop.f32.mrb[0].mxu0
          %v390 = vpop.f32.mrb[0].mxu0
          %v391 = vpop.f32.mrb[0].mxu0
          %392 = vdwg.mxu0
          %v394 = vsel %vm346, %v339, 0
          %v397 = vsel %vm346, %v343, 0
          %399 = vmatprep.subr.bf16.mxu0 0
          %400 = vmatpush1.bf16.xpose.msra.mxu0 %v397
          %401 = vmatprep.subr.bf16.mxu0 0
          %402 = vmatpush1.bf16.xpose.msra.mxu0 0
          %403 = vmatprep.subr.bf16.mxu0 0
          %404 = vmatpush1.bf16.xpose.msra.mxu0 0
          %405 = vmatprep.subr.bf16.mxu0 0
          %406 = vmatpush1.bf16.xpose.msra.mxu0 0
          %407 = vmatprep.subr.bf16.mxu0 0
          %408 = vmatpush1.bf16.xpose.msra.mxu0 0
          %409 = vmatprep.subr.bf16.mxu0 0
          %410 = vmatpush1.bf16.xpose.msra.mxu0 0
          %411 = vmatprep.subr.bf16.mxu0 0
          %412 = vmatpush1.bf16.xpose.msra.mxu0 0
          %413 = vmatprep.subr.bf16.mxu0 0
          %414 = vmatpush1.bf16.xpose.msra.mxu0 0
          %415 = vmatprep.subr.bf16.mxu0 0
          %416 = vmatpush1.bf16.xpose.msra.mxu0 0
          %417 = vmatprep.subr.bf16.mxu0 0
          %418 = vmatpush1.bf16.xpose.msra.mxu0 0
          %419 = vmatprep.subr.bf16.mxu0 0
          %420 = vmatpush1.bf16.xpose.msra.mxu0 0
          %421 = vmatprep.subr.bf16.mxu0 0
          %422 = vmatpush1.bf16.xpose.msra.mxu0 0
          %423 = vmatprep.subr.bf16.mxu0 0
          %424 = vmatpush1.bf16.xpose.msra.mxu0 0
          %425 = vmatprep.subr.bf16.mxu0 0
          %426 = vmatpush1.bf16.xpose.msra.mxu0 0
          %427 = vmatprep.subr.bf16.mxu0 0
          %428 = vmatpush1.bf16.xpose.msra.mxu0 0
          %429 = vmatprep.subr.bf16.mxu0 0
          %430 = vmatpush1.bf16.xpose.msra.mxu0 0
          %431 = vmatprep.mubr.bf16.mxu0 0
          %432 = vmatmul.mubr.bf16.gmra.mrb[0].mxu0 %v394
          %v433 = vpop.f32.mrb[0].mxu0
          %v434 = vadd.f32 0.0, %v433
          %v435 = vpop.f32.mrb[0].mxu0
          %v436 = vpop.f32.mrb[0].mxu0
          %v437 = vpop.f32.mrb[0].mxu0
          %438 = vdwg.mxu0
          %v440 = vsel %vm346, %v340, 0
          %v443 = vsel %vm346, %v344, 0
          %445 = vmatprep.subr.bf16.mxu0 0
          %446 = vmatpush1.bf16.xpose.msra.mxu0 %v443
          %447 = vmatprep.subr.bf16.mxu0 0
          %448 = vmatpush1.bf16.xpose.msra.mxu0 0
          %449 = vmatprep.subr.bf16.mxu0 0
          %450 = vmatpush1.bf16.xpose.msra.mxu0 0
          %451 = vmatprep.subr.bf16.mxu0 0
          %452 = vmatpush1.bf16.xpose.msra.mxu0 0
          %453 = vmatprep.subr.bf16.mxu0 0
          %454 = vmatpush1.bf16.xpose.msra.mxu0 0
          %455 = vmatprep.subr.bf16.mxu0 0
          %456 = vmatpush1.bf16.xpose.msra.mxu0 0
          %457 = vmatprep.subr.bf16.mxu0 0
          %458 = vmatpush1.bf16.xpose.msra.mxu0 0
          %459 = vmatprep.subr.bf16.mxu0 0
          %460 = vmatpush1.bf16.xpose.msra.mxu0 0
          %461 = vmatprep.subr.bf16.mxu0 0
          %462 = vmatpush1.bf16.xpose.msra.mxu0 0
          %463 = vmatprep.subr.bf16.mxu0 0
          %464 = vmatpush1.bf16.xpose.msra.mxu0 0
          %465 = vmatprep.subr.bf16.mxu0 0
          %466 = vmatpush1.bf16.xpose.msra.mxu0 0
          %467 = vmatprep.subr.bf16.mxu0 0
          %468 = vmatpush1.bf16.xpose.msra.mxu0 0
          %469 = vmatprep.subr.bf16.mxu0 0
          %470 = vmatpush1.bf16.xpose.msra.mxu0 0
          %471 = vmatprep.subr.bf16.mxu0 0
          %472 = vmatpush1.bf16.xpose.msra.mxu0 0
          %473 = vmatprep.subr.bf16.mxu0 0
          %474 = vmatpush1.bf16.xpose.msra.mxu0 0
          %475 = vmatprep.subr.bf16.mxu0 0
          %476 = vmatpush1.bf16.xpose.msra.mxu0 0
          %477 = vmatprep.mubr.bf16.mxu0 0
          %478 = vmatmul.mubr.bf16.gmra.mrb[0].mxu0 %v440
          %v479 = vpop.f32.mrb[0].mxu0
          %v480 = vadd.f32 0.0, %v479
          %v481 = vpop.f32.mrb[0].mxu0
          %v482 = vpop.f32.mrb[0].mxu0
          %v483 = vpop.f32.mrb[0].mxu0
          %484 = vdwg.mxu0
          %v486 = vsel %vm346, %v341, 0
          %v489 = vsel %vm346, %v345, 0
          %491 = vmatprep.subr.bf16.mxu0 0
          %492 = vmatpush1.bf16.xpose.msra.mxu0 %v489
          %493 = vmatprep.subr.bf16.mxu0 0
          %494 = vmatpush1.bf16.xpose.msra.mxu0 0
          %495 = vmatprep.subr.bf16.mxu0 0
          %496 = vmatpush1.bf16.xpose.msra.mxu0 0
          %497 = vmatprep.subr.bf16.mxu0 0
          %498 = vmatpush1.bf16.xpose.msra.mxu0 0
          %499 = vmatprep.subr.bf16.mxu0 0
          %500 = vmatpush1.bf16.xpose.msra.mxu0 0
          %501 = vmatprep.subr.bf16.mxu0 0
          %502 = vmatpush1.bf16.xpose.msra.mxu0 0
          %503 = vmatprep.subr.bf16.mxu0 0
          %504 = vmatpush1.bf16.xpose.msra.mxu0 0
          %505 = vmatprep.subr.bf16.mxu0 0
          %506 = vmatpush1.bf16.xpose.msra.mxu0 0
          %507 = vmatprep.subr.bf16.mxu0 0
          %508 = vmatpush1.bf16.xpose.msra.mxu0 0
          %509 = vmatprep.subr.bf16.mxu0 0
          %510 = vmatpush1.bf16.xpose.msra.mxu0 0
          %511 = vmatprep.subr.bf16.mxu0 0
          %512 = vmatpush1.bf16.xpose.msra.mxu0 0
          %513 = vmatprep.subr.bf16.mxu0 0
          %514 = vmatpush1.bf16.xpose.msra.mxu0 0
          %515 = vmatprep.subr.bf16.mxu0 0
          %516 = vmatpush1.bf16.xpose.msra.mxu0 0
          %517 = vmatprep.subr.bf16.mxu0 0
          %518 = vmatpush1.bf16.xpose.msra.mxu0 0
          %519 = vmatprep.subr.bf16.mxu0 0
          %520 = vmatpush1.bf16.xpose.msra.mxu0 0
          %521 = vmatprep.subr.bf16.mxu0 0
          %522 = vmatpush1.bf16.xpose.msra.mxu0 0
          %523 = vmatprep.mubr.bf16.mxu0 0
          %524 = vmatmul.mubr.bf16.gmra.mrb[0].mxu0 %v486
          %v525 = vpop.f32.mrb[0].mxu0
          %v526 = vadd.f32 0.0, %v525
          %v527 = vpop.f32.mrb[0].mxu0
          %v528 = vpop.f32.mrb[0].mxu0
          %v529 = vpop.f32.mrb[0].mxu0
          %530 = vdwg.mxu0
          %v531 = vlaneseq
          %v532 = vshrl.u32 %v531, 7
          %v533 = vstv %s332
          %v534 = vadd.s32 %v533, %v532
          %v535 = vlaneseq
          %v536 = vand.u32 %v535, 127
          %v537 = vstv %s331
          %v538 = vadd.s32 %v537, %v536
          %vm539 = vcmp.le.s32.totalorder %v538, %v534
          %v540 = vsel %vm539, 1, 0
          %vm541 = vcmp.eq.s32.totalorder %v540, 1
          %v542 = vsel %vm541, %v388, -1e+09
          %v543 = vsel %vm541, %v434, -1e+09
          %v544 = vsel %vm541, %v480, -1e+09
          %v545 = vsel %vm541, %v526, -1e+09
          %v546 = vld [vmem:[#allocation2] sm:$0xff]
          %v547 = vld [vmem:[#allocation2 + $0x8] sm:$0xff]
          %v548 = vld [vmem:[#allocation2 + $0x10] sm:$0xff]
          %v549 = vld [vmem:[#allocation2 + $0x18] sm:$0xff]
          %v550 = vsel %vm346, %v542, -inf
          %551 = vmax.xlane.f32.xlu0 %v550
          %v552 = vpop.xlane.xlu0 %551
          %v553 = vsel %vm346, %v543, -inf
          %554 = vmax.xlane.f32.xlu0 %v553
          %v555 = vpop.xlane.xlu0 %554
          %v556 = vsel %vm346, %v544, -inf
          %557 = vmax.xlane.f32.xlu0 %v556
          %v558 = vpop.xlane.xlu0 %557
          %v559 = vsel %vm346, %v545, -inf
          %560 = vmax.xlane.f32.xlu0 %v559
          %v561 = vpop.xlane.xlu0 %560
          %v562 = vmax.f32 %v546, %v552
          %v563 = vmax.f32 %v547, %v555
          %v564 = vmax.f32 %v548, %v558
          %v565 = vmax.f32 %v549, %v561
          %v566 = vsub.f32 %v546, %v562
          %v567 = vsub.f32 %v547, %v563
          %v568 = vsub.f32 %v548, %v564
          %v569 = vsub.f32 %v549, %v565
          %v570 = vmul.f32 %v566, 1.442695
          %v571 = vpow.pop %v570
          %v572 = vmul.f32 %v567, 1.442695
          %v573 = vpow.pop %v572
          %v574 = vmul.f32 %v568, 1.442695
          %v575 = vpow.pop %v574
          %v576 = vmul.f32 %v569, 1.442695
          %v577 = vpow.pop %v576
          %579 = vset.pattern.permute.xlu0 0
          %580 = vperm.xlu0 %579, %v562
          %v581 = vpop.permute.xlu0 %580
          %584 = vset.pattern.permute.xlu0 0
          %585 = vperm.xlu0 %584, %v563
          %v586 = vpop.permute.xlu0 %585
          %589 = vset.pattern.permute.xlu0 0
          %590 = vperm.xlu0 %589, %v564
          %v591 = vpop.permute.xlu0 %590
          %594 = vset.pattern.permute.xlu0 0
          %595 = vperm.xlu0 %594, %v565
          %v596 = vpop.permute.xlu0 %595
          %v598 = vsub.f32 %v542, %v581
          %v599 = vsub.f32 %v543, %v586
          %v600 = vsub.f32 %v544, %v591
          %v601 = vsub.f32 %v545, %v596
          %v602 = vmul.f32 %v598, 1.442695
          %v603 = vpow.pop %v602
          %v604 = vmul.f32 %v599, 1.442695
          %v605 = vpow.pop %v604
          %v606 = vmul.f32 %v600, 1.442695
          %v607 = vpow.pop %v606
          %v608 = vmul.f32 %v601, 1.442695
          %v609 = vpow.pop %v608
          %v610 = vld [vmem:[#allocation3] sm:$0xff]
          %v611 = vld [vmem:[#allocation3 + $0x8] sm:$0xff]
          %v612 = vld [vmem:[#allocation3 + $0x10] sm:$0xff]
          %v613 = vld [vmem:[#allocation3 + $0x18] sm:$0xff]
          %v614 = vmul.f32 %v571, %v610
          %v615 = vmul.f32 %v573, %v611
          %v616 = vmul.f32 %v575, %v612
          %v617 = vmul.f32 %v577, %v613
          %v618 = vsel %vm346, %v603, 0.0
          %619 = vadd.xlane.f32.xlu0 %v618
          %v620 = vpop.xlane.xlu0 %619
          %v621 = vsel %vm346, %v605, 0.0
          %622 = vadd.xlane.f32.xlu0 %v621
          %v623 = vpop.xlane.xlu0 %622
          %v624 = vsel %vm346, %v607, 0.0
          %625 = vadd.xlane.f32.xlu0 %v624
          %v626 = vpop.xlane.xlu0 %625
          %v627 = vsel %vm346, %v609, 0.0
          %628 = vadd.xlane.f32.xlu0 %v627
          %v629 = vpop.xlane.xlu0 %628
          %v630 = vadd.f32 %v614, %v620
          %v631 = vadd.f32 %v615, %v623
          %v632 = vadd.f32 %v616, %v626
          %v633 = vadd.f32 %v617, %v629
          %vm634 = vcmask 7168
          %635 = vst.msk [vmem:[#allocation3] sm:$0xff] %vm634, %v630
          %636 = vst.msk [vmem:[#allocation3 + $0x8] sm:$0xff] %vm634, %v631
          %637 = vst.msk [vmem:[#allocation3 + $0x10] sm:$0xff] %vm634, %v632
          %638 = vst.msk [vmem:[#allocation3 + $0x18] sm:$0xff] %vm634, %v633
          %v639 = vld [vmem:[#allocation4] sm:$0xff]
          %v640 = vld [vmem:[#allocation4 + $0x8] sm:$0xff]
          %v641 = vld [vmem:[#allocation4 + $0x10] sm:$0xff]
          %v642 = vld [vmem:[#allocation4 + $0x18] sm:$0xff]
          %644 = vset.pattern.permute.xlu0 0
          %645 = vperm.xlu0 %644, %v571
          %v646 = vpop.permute.xlu0 %645
          %649 = vset.pattern.permute.xlu0 0
          %650 = vperm.xlu0 %649, %v573
          %v651 = vpop.permute.xlu0 %650
          %654 = vset.pattern.permute.xlu0 0
          %655 = vperm.xlu0 %654, %v575
          %v656 = vpop.permute.xlu0 %655
          %659 = vset.pattern.permute.xlu0 0
          %660 = vperm.xlu0 %659, %v577
          %v661 = vpop.permute.xlu0 %660
          %v663 = vmul.f32 %v646, %v639
          %v664 = vmul.f32 %v651, %v640
          %v665 = vmul.f32 %v656, %v641
          %v666 = vmul.f32 %v661, %v642
          %v667 = vpack.c.bf16 %v603, %v603
          %v668 = vpack.c.bf16 %v605, %v605
          %v669 = vpack.c.bf16 %v607, %v607
          %v670 = vpack.c.bf16 %v609, %v609
          %v671 = vld [vmem:[%s275] sm:$0xf]
          %v672 = vld [vmem:[%s275 + $0x4] sm:$0xf]
          %v673 = vld [vmem:[%s275 + $0x8] sm:$0xf]
          %v674 = vld [vmem:[%s275 + $0xc] sm:$0xf]
          %v676 = vsel %vm346, %v667, 0
          %vm678 = vcmask 1043456
          %v680 = vsel %vm678, %v671, 0
          %682 = vmatprep.subr.bf16.mxu0 0
          %683 = vmatpush1.bf16.msra.mxu0 %v680
          %684 = vmatprep.subr.bf16.mxu0 0
          %685 = vmatpush1.bf16.msra.mxu0 0
          %686 = vmatprep.subr.bf16.mxu0 0
          %687 = vmatpush1.bf16.msra.mxu0 0
          %688 = vmatprep.subr.bf16.mxu0 0
          %689 = vmatpush1.bf16.msra.mxu0 0
          %690 = vmatprep.subr.bf16.mxu0 0
          %691 = vmatpush1.bf16.msra.mxu0 0
          %692 = vmatprep.subr.bf16.mxu0 0
          %693 = vmatpush1.bf16.msra.mxu0 0
          %694 = vmatprep.subr.bf16.mxu0 0
          %695 = vmatpush1.bf16.msra.mxu0 0
          %696 = vmatprep.subr.bf16.mxu0 0
          %697 = vmatpush1.bf16.msra.mxu0 0
          %698 = vmatprep.subr.bf16.mxu0 0
          %699 = vmatpush1.bf16.msra.mxu0 0
          %700 = vmatprep.subr.bf16.mxu0 0
          %701 = vmatpush1.bf16.msra.mxu0 0
          %702 = vmatprep.subr.bf16.mxu0 0
          %703 = vmatpush1.bf16.msra.mxu0 0
          %704 = vmatprep.subr.bf16.mxu0 0
          %705 = vmatpush1.bf16.msra.mxu0 0
          %706 = vmatprep.subr.bf16.mxu0 0
          %707 = vmatpush1.bf16.msra.mxu0 0
          %708 = vmatprep.subr.bf16.mxu0 0
          %709 = vmatpush1.bf16.msra.mxu0 0
          %710 = vmatprep.subr.bf16.mxu0 0
          %711 = vmatpush1.bf16.msra.mxu0 0
          %712 = vmatprep.subr.bf16.mxu0 0
          %713 = vmatpush1.bf16.msra.mxu0 0
          %714 = vmatprep.mubr.bf16.mxu0 0
          %715 = vmatmul.mubr.bf16.gmra.mrb[0].mxu0 %v676
          %v716 = vpop.f32.mrb[0].mxu0
          %v717 = vadd.f32 0.0, %v716
          %v718 = vpop.f32.mrb[0].mxu0
          %v719 = vpop.f32.mrb[0].mxu0
          %v720 = vpop.f32.mrb[0].mxu0
          %721 = vdwg.mxu0
          %v723 = vsel %vm346, %v668, 0
          %v726 = vsel %vm678, %v672, 0
          %728 = vmatprep.subr.bf16.mxu0 0
          %729 = vmatpush1.bf16.msra.mxu0 %v726
          %730 = vmatprep.subr.bf16.mxu0 0
          %731 = vmatpush1.bf16.msra.mxu0 0
          %732 = vmatprep.subr.bf16.mxu0 0
          %733 = vmatpush1.bf16.msra.mxu0 0
          %734 = vmatprep.subr.bf16.mxu0 0
          %735 = vmatpush1.bf16.msra.mxu0 0
          %736 = vmatprep.subr.bf16.mxu0 0
          %737 = vmatpush1.bf16.msra.mxu0 0
          %738 = vmatprep.subr.bf16.mxu0 0
          %739 = vmatpush1.bf16.msra.mxu0 0
          %740 = vmatprep.subr.bf16.mxu0 0
          %741 = vmatpush1.bf16.msra.mxu0 0
          %742 = vmatprep.subr.bf16.mxu0 0
          %743 = vmatpush1.bf16.msra.mxu0 0
          %744 = vmatprep.subr.bf16.mxu0 0
          %745 = vmatpush1.bf16.msra.mxu0 0
          %746 = vmatprep.subr.bf16.mxu0 0
          %747 = vmatpush1.bf16.msra.mxu0 0
          %748 = vmatprep.subr.bf16.mxu0 0
          %749 = vmatpush1.bf16.msra.mxu0 0
          %750 = vmatprep.subr.bf16.mxu0 0
          %751 = vmatpush1.bf16.msra.mxu0 0
          %752 = vmatprep.subr.bf16.mxu0 0
          %753 = vmatpush1.bf16.msra.mxu0 0
          %754 = vmatprep.subr.bf16.mxu0 0
          %755 = vmatpush1.bf16.msra.mxu0 0
          %756 = vmatprep.subr.bf16.mxu0 0
          %757 = vmatpush1.bf16.msra.mxu0 0
          %758 = vmatprep.subr.bf16.mxu0 0
          %759 = vmatpush1.bf16.msra.mxu0 0
          %760 = vmatprep.mubr.bf16.mxu0 0
          %761 = vmatmul.mubr.bf16.gmra.mrb[0].mxu0 %v723
          %v762 = vpop.f32.mrb[0].mxu0
          %v763 = vadd.f32 0.0, %v762
          %v764 = vpop.f32.mrb[0].mxu0
          %v765 = vpop.f32.mrb[0].mxu0
          %v766 = vpop.f32.mrb[0].mxu0
          %767 = vdwg.mxu0
          %v769 = vsel %vm346, %v669, 0
          %v772 = vsel %vm678, %v673, 0
          %774 = vmatprep.subr.bf16.mxu0 0
          %775 = vmatpush1.bf16.msra.mxu0 %v772
          %776 = vmatprep.subr.bf16.mxu0 0
          %777 = vmatpush1.bf16.msra.mxu0 0
          %778 = vmatprep.subr.bf16.mxu0 0
          %779 = vmatpush1.bf16.msra.mxu0 0
          %780 = vmatprep.subr.bf16.mxu0 0
          %781 = vmatpush1.bf16.msra.mxu0 0
          %782 = vmatprep.subr.bf16.mxu0 0
          %783 = vmatpush1.bf16.msra.mxu0 0
          %784 = vmatprep.subr.bf16.mxu0 0
          %785 = vmatpush1.bf16.msra.mxu0 0
          %786 = vmatprep.subr.bf16.mxu0 0
          %787 = vmatpush1.bf16.msra.mxu0 0
          %788 = vmatprep.subr.bf16.mxu0 0
          %789 = vmatpush1.bf16.msra.mxu0 0
          %790 = vmatprep.subr.bf16.mxu0 0
          %791 = vmatpush1.bf16.msra.mxu0 0
          %792 = vmatprep.subr.bf16.mxu0 0
          %793 = vmatpush1.bf16.msra.mxu0 0
          %794 = vmatprep.subr.bf16.mxu0 0
          %795 = vmatpush1.bf16.msra.mxu0 0
          %796 = vmatprep.subr.bf16.mxu0 0
          %797 = vmatpush1.bf16.msra.mxu0 0
          %798 = vmatprep.subr.bf16.mxu0 0
          %799 = vmatpush1.bf16.msra.mxu0 0
          %800 = vmatprep.subr.bf16.mxu0 0
          %801 = vmatpush1.bf16.msra.mxu0 0
          %802 = vmatprep.subr.bf16.mxu0 0
          %803 = vmatpush1.bf16.msra.mxu0 0
          %804 = vmatprep.subr.bf16.mxu0 0
          %805 = vmatpush1.bf16.msra.mxu0 0
          %806 = vmatprep.mubr.bf16.mxu0 0
          %807 = vmatmul.mubr.bf16.gmra.mrb[0].mxu0 %v769
          %v808 = vpop.f32.mrb[0].mxu0
          %v809 = vadd.f32 0.0, %v808
          %v810 = vpop.f32.mrb[0].mxu0
          %v811 = vpop.f32.mrb[0].mxu0
          %v812 = vpop.f32.mrb[0].mxu0
          %813 = vdwg.mxu0
          %v815 = vsel %vm346, %v670, 0
          %v818 = vsel %vm678, %v674, 0
          %820 = vmatprep.subr.bf16.mxu0 0
          %821 = vmatpush1.bf16.msra.mxu0 %v818
          %822 = vmatprep.subr.bf16.mxu0 0
          %823 = vmatpush1.bf16.msra.mxu0 0
          %824 = vmatprep.subr.bf16.mxu0 0
          %825 = vmatpush1.bf16.msra.mxu0 0
          %826 = vmatprep.subr.bf16.mxu0 0
          %827 = vmatpush1.bf16.msra.mxu0 0
          %828 = vmatprep.subr.bf16.mxu0 0
          %829 = vmatpush1.bf16.msra.mxu0 0
          %830 = vmatprep.subr.bf16.mxu0 0
          %831 = vmatpush1.bf16.msra.mxu0 0
          %832 = vmatprep.subr.bf16.mxu0 0
          %833 = vmatpush1.bf16.msra.mxu0 0
          %834 = vmatprep.subr.bf16.mxu0 0
          %835 = vmatpush1.bf16.msra.mxu0 0
          %836 = vmatprep.subr.bf16.mxu0 0
          %837 = vmatpush1.bf16.msra.mxu0 0
          %838 = vmatprep.subr.bf16.mxu0 0
          %839 = vmatpush1.bf16.msra.mxu0 0
          %840 = vmatprep.subr.bf16.mxu0 0
          %841 = vmatpush1.bf16.msra.mxu0 0
          %842 = vmatprep.subr.bf16.mxu0 0
          %843 = vmatpush1.bf16.msra.mxu0 0
          %844 = vmatprep.subr.bf16.mxu0 0
          %845 = vmatpush1.bf16.msra.mxu0 0
          %846 = vmatprep.subr.bf16.mxu0 0
          %847 = vmatpush1.bf16.msra.mxu0 0
          %848 = vmatprep.subr.bf16.mxu0 0
          %849 = vmatpush1.bf16.msra.mxu0 0
          %850 = vmatprep.subr.bf16.mxu0 0
          %851 = vmatpush1.bf16.msra.mxu0 0
          %852 = vmatprep.mubr.bf16.mxu0 0
          %853 = vmatmul.mubr.bf16.gmra.mrb[0].mxu0 %v815
          %v854 = vpop.f32.mrb[0].mxu0
          %v855 = vadd.f32 0.0, %v854
          %v856 = vpop.f32.mrb[0].mxu0
          %v857 = vpop.f32.mrb[0].mxu0
          %v858 = vpop.f32.mrb[0].mxu0
          %859 = vdwg.mxu0
          %v860 = vadd.f32 %v663, %v717
          %v861 = vadd.f32 %v664, %v763
          %v862 = vadd.f32 %v665, %v809
          %v863 = vadd.f32 %v666, %v855
          %864 = vst.msk [vmem:[#allocation4] sm:$0xff] %vm346, %v860
          %865 = vst.msk [vmem:[#allocation4 + $0x8] sm:$0xff] %vm346, %v861
          %866 = vst.msk [vmem:[#allocation4 + $0x10] sm:$0xff] %vm346, %v862
          %867 = vst.msk [vmem:[#allocation4 + $0x18] sm:$0xff] %vm346, %v863
          %868 = vst.msk [vmem:[#allocation2] sm:$0xff] %vm634, %v562
          %869 = vst.msk [vmem:[#allocation2 + $0x8] sm:$0xff] %vm634, %v563
          %870 = vst.msk [vmem:[#allocation2 + $0x10] sm:$0xff] %vm634, %v564
          %871 = vst.msk [vmem:[#allocation2 + $0x18] sm:$0xff] %vm634, %v565
        $region52: #{transformer_lm_forward.10} parent=31 // pred_fallthru
          _
        // Predicated region
        $region53: #{transformer_lm_forward.10} parent=31 // pred_check
          %p872 = pneg %p313
        $region54: #{transformer_lm_forward.10} parent=31 // pred_check_branch
          %874 = sbr.rel (%p872) target = $region56
        $region55: #{transformer_lm_forward.10} parent=31 // pred_region
          %v875 = vld [vmem:[#allocation4] sm:$0xff]
          %v876 = vld [vmem:[#allocation4 + $0x8] sm:$0xff]
          %v877 = vld [vmem:[#allocation4 + $0x10] sm:$0xff]
          %v878 = vld [vmem:[#allocation4 + $0x18] sm:$0xff]
          %v879 = vld [vmem:[#allocation3] sm:$0xff]
          %v880 = vld [vmem:[#allocation3 + $0x8] sm:$0xff]
          %v881 = vld [vmem:[#allocation3 + $0x10] sm:$0xff]
          %v882 = vld [vmem:[#allocation3 + $0x18] sm:$0xff]
          %v883 = vrcp.pop %v879
          %v884 = vrcp.pop %v880
          %v885 = vrcp.pop %v881
          %v886 = vrcp.pop %v882
          %888 = vset.pattern.permute.xlu0 0
          %889 = vperm.xlu0 %888, %v883
          %v890 = vpop.permute.xlu0 %889
          %893 = vset.pattern.permute.xlu0 0
          %894 = vperm.xlu0 %893, %v884
          %v895 = vpop.permute.xlu0 %894
          %898 = vset.pattern.permute.xlu0 0
          %899 = vperm.xlu0 %898, %v885
          %v900 = vpop.permute.xlu0 %899
          %903 = vset.pattern.permute.xlu0 0
          %904 = vperm.xlu0 %903, %v886
          %v905 = vpop.permute.xlu0 %904
          %v907 = vmul.f32 %v875, %v890
          %v908 = vmul.f32 %v876, %v895
          %v909 = vmul.f32 %v877, %v900
          %v910 = vmul.f32 %v878, %v905
          %v911 = vpack.c.bf16 %v907, %v907
          %v912 = vpack.c.bf16 %v908, %v908
          %v913 = vpack.c.bf16 %v909, %v909
          %v914 = vpack.c.bf16 %v910, %v910
          %vm915 = vcmask 60416
          %916 = vst.msk [vmem:[%s307] sm:$0xf] %vm915, %v911
          %917 = vst.msk [vmem:[%s307 + $0x4] sm:$0xf] %vm915, %v912
          %918 = vst.msk [vmem:[%s307 + $0x8] sm:$0xf] %vm915, %v913
          %919 = vst.msk [vmem:[%s307 + $0xc] sm:$0xf] %vm915, %v914
        $region56: #{transformer_lm_forward.10} parent=31 // pred_fallthru
          _
        %s920 = sand.u32 %s144, 1
        %s921 = scalar_lea.sflag [#allocation7], %s920
        %s922 = sand.u32 %s144, 1
        %s923 = smul.addr %s922, 16
        %s924 = scalar_lea.vmem [#allocation11], %s923
        // Predicated region
        $region57: #{transformer_lm_forward.10} parent=31 // pred_check
          %p925 = pneg %p154
        $region58: #{transformer_lm_forward.10} parent=31 // pred_check_branch
          %927 = sbr.rel (%p925) target = $region60
        $region59: #{transformer_lm_forward.10} parent=31 // pred_region
          %s929 = ssub.s32 256, 256
          %930 = vsyncadd %s921, %s929
          %s931 = smul.addr %s28, 4
          %s932 = sadd.s32 %s29, %s931
          %s933 = smul.addr %s932, 64
          %s934 = scalar_lea.hbm %s3, %s933
          %s935 = sshll.u32 %s924, 4
          %s936 = int_to_ptr.vmem [resolvable:$true] %s935
          %941 = dma.vmem_to_hbm [thread:$0]  %s936, 256, %s934, %s921, 64, 64, 4
        $region60: #{transformer_lm_forward.10} parent=31 // pred_fallthru
          _
      $region32: #{transformer_lm_forward.10} parent=5 // pred_fallthru
        _
      %p942 = scmp.le.s32.totalorder 2, %s18
      // Predicated region
      $region61: #{transformer_lm_forward.10} parent=5 // pred_check
        %p943 = pneg %p942
      $region62: #{transformer_lm_forward.10} parent=5 // pred_check_branch
        %945 = sbr.rel (%p943) target = $region64
      $region63: #{transformer_lm_forward.10} parent=5 // pred_region
        %s946 = ssub.s32 %s18, 2
        // Predicated region
        $region65: #{transformer_lm_forward.10} parent=63 // pred_check
          %p947 = pneg %p160
        $region66: #{transformer_lm_forward.10} parent=63 // pred_check_branch
          %949 = sbr.rel (%p947) target = $region68
        $region67: #{transformer_lm_forward.10} parent=63 // pred_region
          %s950 = sand.u32 %s145, 1
          %s951 = scalar_lea.sflag [#allocation7], %s950
          %s952 = sand.u32 %s145, 1
          %s953 = smul.addr %s952, 16
          %s954 = scalar_lea.vmem [#allocation11], %s953
          %955 = dma.done %s951, 256
        $region68: #{transformer_lm_forward.10} parent=63 // pred_fallthru
          _
      $region64: #{transformer_lm_forward.10} parent=5 // pred_fallthru
        _
    $region6: #{transformer_lm_forward.10} parent=1 // loop_footer
      %s22 = sadd.s32 1, %s18
    $region7: #{transformer_lm_forward.10} parent=1 // loop_footer_branch
      %17 = sbr.rel target = $region3
    $region8: #{transformer_lm_forward.10} parent=1 // loop_exit
      _
    %956 = vsyncpa [#allocation6], 1
    %s957 = scalar_lea.sflag [#allocation6], 1
    %958 = vsyncpa %s957, 1
    %959 = vsyncpa [#allocation9], 1
    %s960 = scalar_lea.sflag [#allocation9], 1
    %961 = vsyncpa %s960, 1
    %962 = vsyncpa [#allocation7], 1
    %s963 = scalar_lea.sflag [#allocation7], 1
    %964 = vsyncpa %s963, 1

</llo_original>
